<compile_context>
chip_gen: v5e
topology: v5e:2x2
jax: 0.10.0
libtpu: 0.0.40
codegen_flags: <defaults>
</compile_context>

<pallas_src>
import jax
import jax.numpy as jnp
from jax.experimental import pallas as pl
from jax.experimental.pallas import tpu as pltpu

NEG_SLOPE = 0.01  # LeakyReLU slope used for `sigma`


def _round_up(x, m):
    return ((x + m - 1) // m) * m


# ----------------------------------------------------------------------------
# Pallas kernel: the ENTIRE bunch layer stack, fused into a single invocation.
# ----------------------------------------------------------------------------
def _make_bunch_stack_kernel(n0p, n1p, n2p, f_pad, num_layers):
    n01 = n0p + n1p
    F = f_pad

    def kernel(x_ref, s0_ref, s1_ref, s2_ref, w_ref, y_ref, v0_ref, v1_ref, v2_ref):
        def mm(a, b):
            return jnp.dot(a, b, preferred_element_type=jnp.float32)

        def act(v):  # LeakyReLU, f32 epilogue: single VPU max + mul
            return jnp.maximum(v, NEG_SLOPE * v)

        # First-layer activations come straight from the packed bf16 input slab.
        x0 = x_ref[:n0p, :]
        x1 = x_ref[n0p:n01, :]
        x2 = x_ref[n01:, :]

        for l in range(num_layers):  # statically unrolled layer stack
            x0b = x0.astype(jnp.bfloat16)
            x1b = x1.astype(jnp.bfloat16)
            x2b = x2.astype(jnp.bfloat16)

            r0 = l * F          # this layer's row band in the weight slab
            r1 = (l + 1) * F
            # 3 fused feature-mixing matmuls (instead of 7 narrow ones).
            # Column layout per layer: [W00 | W10 | W01 | W11 | W21 | W12 | W22]
            y0 = mm(x0b, w_ref[r0:r1, 0 * F:2 * F]).astype(jnp.bfloat16)  # [x0@W00 | x0@W10]
            y1 = mm(x1b, w_ref[r0:r1, 2 * F:5 * F]).astype(jnp.bfloat16)  # [x1@W01 | x1@W11 | x1@W21]
            y2 = mm(x2b, w_ref[r0:r1, 5 * F:7 * F]).astype(jnp.bfloat16)  # [x2@W12 | x2@W22]

            # Scatter into bf16 V slabs; every split point is a multiple of 16.
            v0_ref[:n0p, :] = y0[:, 0 * F:1 * F]
            v0_ref[n0p:, :] = y1[:, 0 * F:1 * F]
            v1_ref[:n0p, :] = y0[:, 1 * F:2 * F]
            v1_ref[n0p:n01, :] = y1[:, 1 * F:2 * F]
            v1_ref[n01:, :] = y2[:, 0 * F:1 * F]
            v2_ref[:n1p, :] = y1[:, 2 * F:3 * F]
            v2_ref[n1p:, :] = y2[:, 1 * F:2 * F]

            # One big-K shift matmul per output cochain (S loaded at use-site,
            # bf16 operands, f32 accumulate + activation).
            x0 = act(mm(s0_ref[...], v0_ref[...]))
            x1 = act(mm(s1_ref[...], v1_ref[...]))
            x2 = act(mm(s2_ref[...], v2_ref[...]))

        # Single packed lane-dense f32 output slab -> one write-back DMA.
        y_ref[:n0p, :] = x0.astype(jnp.float32)
        y_ref[n0p:n01, :] = x1.astype(jnp.float32)
        y_ref[n01:, :] = x2.astype(jnp.float32)

    return kernel


# ----------------------------------------------------------------------------
# Host-side operator assembly / packing.
# ----------------------------------------------------------------------------
def build_complex(key, n0, n1, n2):
    """Deterministic synthetic 2-simplicial-complex operators."""
    k1, k2 = jax.random.split(key)
    b1 = jax.random.randint(k1, (n0, n1), -1, 2).astype(jnp.float32)  # node-edge incidence
    b2 = jax.random.randint(k2, (n1, n2), -1, 2).astype(jnp.float32)  # edge-tri  incidence

    l0 = b1 @ b1.T
    l1 = b1.T @ b1 + b2 @ b2.T
    l2 = b2.T @ b2
    # crude normalization so multi-layer activations stay bounded
    l0 = l0 / (jnp.max(jnp.abs(l0)) + 1.0)
    l1 = l1 / (jnp.max(jnp.abs(l1)) + 1.0)
    l2 = l2 / (jnp.max(jnp.abs(l2)) + 1.0)

    d1 = jnp.diag(1.0 / jnp.maximum(jnp.sum(jnp.abs(b1), axis=1), 1.0))  # n0 x n0
    d2 = jnp.diag(1.0 / jnp.maximum(jnp.sum(jnp.abs(b2), axis=1), 1.0))  # n1 x n1
    d3 = jnp.eye(n1, dtype=jnp.float32) / 3.0                             # n1 x n1
    d5 = jnp.eye(n2, dtype=jnp.float32) / 2.0                             # n2 x n2
    return dict(b1=b1, b2=b2, l0=l0, l1=l1, l2=l2, d1=d1, d2=d2, d3=d3, d5=d5)


def _shift_blocks(ops):
    """The 7 fixed (input-independent) shift matrices of a bunch_conv layer."""
    b1, b2 = ops["b1"], ops["b2"]
    return dict(
        S00=ops["l0"],
        S01=ops["d1"] @ b1 @ ops["d2"],
        S10=ops["d2"] @ b1.T @ ops["d1"],
        S11=ops["l1"],
        S12=ops["d3"] @ b2 @ ops["d5"],
        S21=ops["d5"] @ b2.T @ ops["d3"],
        S22=ops["l2"],
    )


def assemble_packed_shifts(ops, n0p, n1p, n2p, dtype=jnp.bfloat16):
    """Concatenate + zero-pad the shift blocks per output cochain (host-side, once)."""
    s = _shift_blocks(ops)

    def pad(m, r, c):
        return jnp.pad(m, ((0, r - m.shape[0]), (0, c - m.shape[1])))

    s0 = jnp.concatenate([pad(s["S00"], n0p, n0p), pad(s["S01"], n0p, n1p)], axis=1).astype(dtype)
    s1 = jnp.concatenate(
        [pad(s["S10"], n1p, n0p), pad(s["S11"], n1p, n1p), pad(s["S12"], n1p, n2p)], axis=1
    ).astype(dtype)
    s2 = jnp.concatenate([pad(s["S21"], n2p, n1p), pad(s["S22"], n2p, n2p)], axis=1).astype(dtype)
    return s0, s1, s2


def pack_weights(params, f_pad):
    """ONE lane-dense bf16 slab holding every layer's 7 weight matrices.

    Rows [l*f_pad:(l+1)*f_pad] hold layer l; column layout:
      [W00 | W10 | W01 | W11 | W21 | W12 | W22]   (each block f_pad wide).
    """
    order = ("W00", "W10", "W01", "W11", "W21", "W12", "W22")
    num_layers = len(params)
    slab = jnp.zeros((num_layers * f_pad, 7 * f_pad), jnp.bfloat16)
    for l, p in enumerate(params):
        for j, name in enumerate(order):
            w = p[name].astype(jnp.bfloat16)
            slab = slab.at[l * f_pad:l * f_pad + w.shape[0],
                           j * f_pad:j * f_pad + w.shape[1]].set(w)
    return slab


def init_params(key, num_features):
    """Deterministic Xavier-normal-style init for each layer's 7 weight matrices."""
    names = ["W00", "W01", "W10", "W11", "W12", "W21", "W22"]
    params = []
    for l in range(len(num_features) - 1):
        f_in, f_out = num_features[l], num_features[l + 1]
        std = (2.0 / (f_in + f_out)) ** 0.5
        layer = {}
        for name in names:
            key, sub = jax.random.split(key)
            layer[name] = std * jax.random.normal(sub, (f_in, f_out), jnp.float32)
        params.append(layer)
    return params


def _vmem_cap_bytes():
    """Per-core physical VMEM; conservative 64 MiB fallback (v7x) if the query fails."""
    try:
        info = pltpu.get_tpu_info()
        for name in ("vmem_capacity_bytes", "vmem_bytes", "vmem_size_bytes"):
            cap = getattr(info, name, None)
            if cap:
                return int(cap)
    except Exception:
        pass
    return 64 << 20


# ----------------------------------------------------------------------------
# Forward pass: single fused pallas_call for the whole stack.
# ----------------------------------------------------------------------------
def bunch_forward(x_in, ops, params):
    x0, x1, x2 = x_in
    n0, n1, n2 = x0.shape[0], x1.shape[0], x2.shape[0]
    num_layers = len(params)
    feats = [x0.shape[1]] + [p["W00"].shape[1] for p in params]
    f_out = feats[-1]
    f_pad = _round_up(max(feats), 128)  # lane-dense feature width (zero-padding is exact)

    # Pad cochain row counts so every bf16 slab split point is sublane-aligned.
    n0p, n1p, n2p = (_round_up(n, 16) for n in (n0, n1, n2))
    n01 = n0p + n1p
    n_tot = n0p + n1p + n2p

    # Constant, layer-independent packed shift operators (bf16, zero-padded blocks).
    s0, s1, s2 = assemble_packed_shifts(ops, n0p, n1p, n2p)

    # Pack the three cochains into one bf16 slab; zero-pad rows & features.
    def pad_x(x, n_p):
        return jnp.pad(x.astype(jnp.bfloat16),
                       ((0, n_p - x.shape[0]), (0, f_pad - x.shape[1])))

    x_packed = jnp.concatenate([pad_x(x0, n0p), pad_x(x1, n1p), pad_x(x2, n2p)], axis=0)

    # All weights in one lane-dense bf16 slab -> one DMA for the whole stack.
    w_slab = pack_weights(params, f_pad)

    ins = [x_packed, s0, s1, s2, w_slab]

    # Size scoped VMEM from the actual footprint; cap at 80% of physical per-core VMEM
    # (64 MiB on v7x, 128 MiB on v5e/v6e).
    in_bytes = sum(int(a.size) * a.dtype.itemsize for a in ins)
    out_bytes = n_tot * f_pad * 4
    scratch_bytes = ((n0p + n1p) + n_tot + (n1p + n2p)) * f_pad * 2
    needed = 2 * (in_bytes + out_bytes) + scratch_bytes + (8 << 20)
    cap = int(0.8 * _vmem_cap_bytes())
    vmem_limit = int(min(max(needed, 16 << 20), cap))

    vmem = pl.BlockSpec(memory_space=pltpu.MemorySpace.VMEM)
    kernel = _make_bunch_stack_kernel(n0p, n1p, n2p, f_pad, num_layers)

    y = pl.pallas_call(
        kernel,
        out_shape=jax.ShapeDtypeStruct((n_tot, f_pad), jnp.float32),
        in_specs=[vmem] * len(ins),
        out_specs=vmem,
        scratch_shapes=[
            pltpu.VMEM((n0p + n1p, f_pad), jnp.bfloat16),  # V for the node update
            pltpu.VMEM((n_tot, f_pad), jnp.bfloat16),      # V for the edge update
            pltpu.VMEM((n1p + n2p, f_pad), jnp.bfloat16),  # V for the triangle update
        ],
        compiler_params=pltpu.CompilerParams(vmem_limit_bytes=vmem_limit),
    )(*ins)

    return (y[:n0, :f_out],
            y[n0p:n0p + n1, :f_out],
            y[n01:n01 + n2, :f_out])


# ----------------------------------------------------------------------------
# Pure-JAX reference (same bf16-operand / f32-accumulate recipe) for validation.
# ----------------------------------------------------------------------------
def bunch_reference(x_in, ops, params):
    x0, x1, x2 = x_in
    s = _shift_blocks(ops)

    def bf(a):
        return a.astype(jnp.bfloat16)

    def mm(a, b):
        return jnp.dot(bf(a), bf(b), preferred_element_type=jnp.float32)

    def leaky_relu(v):
        return jnp.where(v > 0, v, NEG_SLOPE * v)

    s0 = jnp.concatenate([s["S00"], s["S01"]], axis=1)
    s1 = jnp.concatenate([s["S10"], s["S11"], s["S12"]], axis=1)
    s2 = jnp.concatenate([s["S21"], s["S22"]], axis=1)
    for p in params:
        v0 = jnp.concatenate([mm(x0, p["W00"]), mm(x1, p["W01"])], axis=0)
        v1 = jnp.concatenate([mm(x0, p["W10"]), mm(x1, p["W11"]), mm(x2, p["W12"])], axis=0)
        v2 = jnp.concatenate([mm(x1, p["W21"]), mm(x2, p["W22"])], axis=0)
        x0 = leaky_relu(mm(s0, v0))
        x1 = leaky_relu(mm(s1, v1))
        x2 = leaky_relu(mm(s2, v2))
    return x0, x1, x2


# ----------------------------------------------------------------------------
if __name__ == "__main__":
    key = jax.random.PRNGKey(0)
    k_cplx, k_par, k0, k1x, k2x = jax.random.split(key, 5)

    # small synthetic complex: 8 nodes, 16 edges, 8 triangles
    n0, n1, n2 = 8, 16, 8
    F_in, F_intermediate, F_out = 8, [16], 8
    num_features = [F_in] + list(F_intermediate) + [F_out]

    ops = build_complex(k_cplx, n0, n1, n2)
    params = init_params(k_par, num_features)

    x0 = jax.random.normal(k0, (n0, F_in), jnp.float32)
    x1 = jax.random.normal(k1x, (n1, F_in), jnp.float32)
    x2 = jax.random.normal(k2x, (n2, F_in), jnp.float32)

    y0, y1, y2 = bunch_forward((x0, x1, x2), ops, params)
    jax.block_until_ready((y0, y1, y2))

    assert y0.shape == (n0, F_out) and y1.shape == (n1, F_out) and y2.shape == (n2, F_out)

    # numerical check against a pure-JAX reference using the same precision recipe
    r0, r1, r2 = bunch_reference((x0, x1, x2), ops, params)
    for got, ref in ((y0, r0), (y1, r1), (y2, r2)):
        assert jnp.allclose(got, ref, rtol=2e-2, atol=2e-2), float(jnp.max(jnp.abs(got - ref)))

    print("KERNEL_OK")
</pallas_src>

<mosaic_0001>
module attributes {stable_mosaic.version = 11 : i64} {
  func.func @kernel(%arg0: memref<48x128xbf16, #tpu.memory_space<vmem>>, %arg1: memref<16x32xbf16, #tpu.memory_space<vmem>>, %arg2: memref<16x48xbf16, #tpu.memory_space<vmem>>, %arg3: memref<16x32xbf16, #tpu.memory_space<vmem>>, %arg4: memref<256x896xbf16, #tpu.memory_space<vmem>>, %arg5: memref<48x128xf32, #tpu.memory_space<vmem>>, %arg6: memref<32x128xbf16, #tpu.memory_space<vmem>>, %arg7: memref<48x128xbf16, #tpu.memory_space<vmem>>, %arg8: memref<32x128xbf16, #tpu.memory_space<vmem>>) attributes {dimension_semantics = [], scalar_prefetch = 0 : i64, scratch_operands = 3 : i64, tpu.core_type = #tpu.core_type<tc>} {
    %c0 = arith.constant 0 : index
    %c0_0 = arith.constant 0 : index
    %0 = vector.load %arg0[%c0, %c0_0] : memref<48x128xbf16, #tpu.memory_space<vmem>>, vector<16x128xbf16>
    %c16 = arith.constant 16 : index
    %c0_1 = arith.constant 0 : index
    %1 = vector.load %arg0[%c16, %c0_1] : memref<48x128xbf16, #tpu.memory_space<vmem>>, vector<16x128xbf16>
    %c32 = arith.constant 32 : index
    %c0_2 = arith.constant 0 : index
    %2 = vector.load %arg0[%c32, %c0_2] : memref<48x128xbf16, #tpu.memory_space<vmem>>, vector<16x128xbf16>
    %c0_3 = arith.constant 0 : index
    %c0_4 = arith.constant 0 : index
    %3 = vector.load %arg4[%c0_3, %c0_4] : memref<256x896xbf16, #tpu.memory_space<vmem>>, vector<128x256xbf16>
    %cst = arith.constant dense<0.000000e+00> : vector<16x256xf32>
    %4 = tpu.matmul %0, %3, %cst {dimension_numbers = #tpu.dot_dimension_numbers<[1], [0], [0], [1], [0, 0, 1, 1], [], []>} : vector<16x128xbf16>, vector<128x256xbf16>, vector<16x256xf32> -> vector<16x256xf32>
    %5 = arith.truncf %4 : vector<16x256xf32> to vector<16x256xbf16>
    %c0_5 = arith.constant 0 : index
    %c256 = arith.constant 256 : index
    %6 = vector.load %arg4[%c0_5, %c256] : memref<256x896xbf16, #tpu.memory_space<vmem>>, vector<128x384xbf16>
    %cst_6 = arith.constant dense<0.000000e+00> : vector<16x384xf32>
    %7 = tpu.matmul %1, %6, %cst_6 {dimension_numbers = #tpu.dot_dimension_numbers<[1], [0], [0], [1], [0, 0, 1, 1], [], []>} : vector<16x128xbf16>, vector<128x384xbf16>, vector<16x384xf32> -> vector<16x384xf32>
    %8 = arith.truncf %7 : vector<16x384xf32> to vector<16x384xbf16>
    %c0_7 = arith.constant 0 : index
    %c640 = arith.constant 640 : index
    %9 = vector.load %arg4[%c0_7, %c640] : memref<256x896xbf16, #tpu.memory_space<vmem>>, vector<128x256xbf16>
    %cst_8 = arith.constant dense<0.000000e+00> : vector<16x256xf32>
    %10 = tpu.matmul %2, %9, %cst_8 {dimension_numbers = #tpu.dot_dimension_numbers<[1], [0], [0], [1], [0, 0, 1, 1], [], []>} : vector<16x128xbf16>, vector<128x256xbf16>, vector<16x256xf32> -> vector<16x256xf32>
    %11 = arith.truncf %10 : vector<16x256xf32> to vector<16x256xbf16>
    %12 = vector.extract_strided_slice %5 {offsets = [0, 0], sizes = [16, 128], strides = [1, 1]} : vector<16x256xbf16> to vector<16x128xbf16>
    %c0_9 = arith.constant 0 : index
    %c0_10 = arith.constant 0 : index
    %13 = vector.load %arg6[%c0_9, %c0_10] : memref<32x128xbf16, #tpu.memory_space<vmem>>, vector<16x128xbf16>
    tpu.vector_store %arg6[%c0_9, %c0_10], %12 {strides = array<i32>} : memref<32x128xbf16, #tpu.memory_space<vmem>>, vector<16x128xbf16>,
    %14 = vector.extract_strided_slice %8 {offsets = [0, 0], sizes = [16, 128], strides = [1, 1]} : vector<16x384xbf16> to vector<16x128xbf16>
    %c16_11 = arith.constant 16 : index
    %c0_12 = arith.constant 0 : index
    %15 = vector.load %arg6[%c16_11, %c0_12] : memref<32x128xbf16, #tpu.memory_space<vmem>>, vector<16x128xbf16>
    tpu.vector_store %arg6[%c16_11, %c0_12], %14 {strides = array<i32>} : memref<32x128xbf16, #tpu.memory_space<vmem>>, vector<16x128xbf16>,
    %16 = vector.extract_strided_slice %5 {offsets = [0, 128], sizes = [16, 128], strides = [1, 1]} : vector<16x256xbf16> to vector<16x128xbf16>
    %c0_13 = arith.constant 0 : index
    %c0_14 = arith.constant 0 : index
    %17 = vector.load %arg7[%c0_13, %c0_14] : memref<48x128xbf16, #tpu.memory_space<vmem>>, vector<16x128xbf16>
    tpu.vector_store %arg7[%c0_13, %c0_14], %16 {strides = array<i32>} : memref<48x128xbf16, #tpu.memory_space<vmem>>, vector<16x128xbf16>,
    %18 = vector.extract_strided_slice %8 {offsets = [0, 128], sizes = [16, 128], strides = [1, 1]} : vector<16x384xbf16> to vector<16x128xbf16>
    %c16_15 = arith.constant 16 : index
    %c0_16 = arith.constant 0 : index
    %19 = vector.load %arg7[%c16_15, %c0_16] : memref<48x128xbf16, #tpu.memory_space<vmem>>, vector<16x128xbf16>
    tpu.vector_store %arg7[%c16_15, %c0_16], %18 {strides = array<i32>} : memref<48x128xbf16, #tpu.memory_space<vmem>>, vector<16x128xbf16>,
    %20 = vector.extract_strided_slice %11 {offsets = [0, 0], sizes = [16, 128], strides = [1, 1]} : vector<16x256xbf16> to vector<16x128xbf16>
    %c32_17 = arith.constant 32 : index
    %c0_18 = arith.constant 0 : index
    %21 = vector.load %arg7[%c32_17, %c0_18] : memref<48x128xbf16, #tpu.memory_space<vmem>>, vector<16x128xbf16>
    tpu.vector_store %arg7[%c32_17, %c0_18], %20 {strides = array<i32>} : memref<48x128xbf16, #tpu.memory_space<vmem>>, vector<16x128xbf16>,
    %22 = vector.extract_strided_slice %8 {offsets = [0, 256], sizes = [16, 128], strides = [1, 1]} : vector<16x384xbf16> to vector<16x128xbf16>
    %c0_19 = arith.constant 0 : index
    %c0_20 = arith.constant 0 : index
    %23 = vector.load %arg8[%c0_19, %c0_20] : memref<32x128xbf16, #tpu.memory_space<vmem>>, vector<16x128xbf16>
    tpu.vector_store %arg8[%c0_19, %c0_20], %22 {strides = array<i32>} : memref<32x128xbf16, #tpu.memory_space<vmem>>, vector<16x128xbf16>,
    %24 = vector.extract_strided_slice %11 {offsets = [0, 128], sizes = [16, 128], strides = [1, 1]} : vector<16x256xbf16> to vector<16x128xbf16>
    %c16_21 = arith.constant 16 : index
    %c0_22 = arith.constant 0 : index
    %25 = vector.load %arg8[%c16_21, %c0_22] : memref<32x128xbf16, #tpu.memory_space<vmem>>, vector<16x128xbf16>
    tpu.vector_store %arg8[%c16_21, %c0_22], %24 {strides = array<i32>} : memref<32x128xbf16, #tpu.memory_space<vmem>>, vector<16x128xbf16>,
    %c0_23 = arith.constant 0 : index
    %c0_24 = arith.constant 0 : index
    %26 = vector.load %arg1[%c0_23, %c0_24] : memref<16x32xbf16, #tpu.memory_space<vmem>>, vector<16x32xbf16>
    %c0_25 = arith.constant 0 : index
    %c0_26 = arith.constant 0 : index
    %27 = vector.load %arg6[%c0_25, %c0_26] : memref<32x128xbf16, #tpu.memory_space<vmem>>, vector<32x128xbf16>
    %cst_27 = arith.constant dense<0.000000e+00> : vector<16x128xf32>
    %28 = tpu.matmul %26, %27, %cst_27 {dimension_numbers = #tpu.dot_dimension_numbers<[1], [0], [0], [1], [0, 0, 1, 1], [], []>} : vector<16x32xbf16>, vector<32x128xbf16>, vector<16x128xf32> -> vector<16x128xf32>
    %cst_28 = arith.constant 0.00999999977 : f32
    %29 = vector.broadcast %cst_28 : f32 to vector<16x128xf32>
    %30 = arith.mulf %29, %28 : vector<16x128xf32>
    %31 = arith.maximumf %28, %30 : vector<16x128xf32>
    %c0_29 = arith.constant 0 : index
    %c0_30 = arith.constant 0 : index
    %32 = vector.load %arg2[%c0_29, %c0_30] : memref<16x48xbf16, #tpu.memory_space<vmem>>, vector<16x48xbf16>
    %c0_31 = arith.constant 0 : index
    %c0_32 = arith.constant 0 : index
    %33 = vector.load %arg7[%c0_31, %c0_32] : memref<48x128xbf16, #tpu.memory_space<vmem>>, vector<48x128xbf16>
    %cst_33 = arith.constant dense<0.000000e+00> : vector<16x128xf32>
    %34 = tpu.matmul %32, %33, %cst_33 {dimension_numbers = #tpu.dot_dimension_numbers<[1], [0], [0], [1], [0, 0, 1, 1], [], []>} : vector<16x48xbf16>, vector<48x128xbf16>, vector<16x128xf32> -> vector<16x128xf32>
    %cst_34 = arith.constant 0.00999999977 : f32
    %35 = vector.broadcast %cst_34 : f32 to vector<16x128xf32>
    %36 = arith.mulf %35, %34 : vector<16x128xf32>
    %37 = arith.maximumf %34, %36 : vector<16x128xf32>
    %c0_35 = arith.constant 0 : index
    %c0_36 = arith.constant 0 : index
    %38 = vector.load %arg3[%c0_35, %c0_36] : memref<16x32xbf16, #tpu.memory_space<vmem>>, vector<16x32xbf16>
    %c0_37 = arith.constant 0 : index
    %c0_38 = arith.constant 0 : index
    %39 = vector.load %arg8[%c0_37, %c0_38] : memref<32x128xbf16, #tpu.memory_space<vmem>>, vector<32x128xbf16>
    %cst_39 = arith.constant dense<0.000000e+00> : vector<16x128xf32>
    %40 = tpu.matmul %38, %39, %cst_39 {dimension_numbers = #tpu.dot_dimension_numbers<[1], [0], [0], [1], [0, 0, 1, 1], [], []>} : vector<16x32xbf16>, vector<32x128xbf16>, vector<16x128xf32> -> vector<16x128xf32>
    %cst_40 = arith.constant 0.00999999977 : f32
    %41 = vector.broadcast %cst_40 : f32 to vector<16x128xf32>
    %42 = arith.mulf %41, %40 : vector<16x128xf32>
    %43 = arith.maximumf %40, %42 : vector<16x128xf32>
    %44 = arith.truncf %31 : vector<16x128xf32> to vector<16x128xbf16>
    %45 = arith.truncf %37 : vector<16x128xf32> to vector<16x128xbf16>
    %46 = arith.truncf %43 : vector<16x128xf32> to vector<16x128xbf16>
    %c128 = arith.constant 128 : index
    %c0_41 = arith.constant 0 : index
    %47 = vector.load %arg4[%c128, %c0_41] : memref<256x896xbf16, #tpu.memory_space<vmem>>, vector<128x256xbf16>
    %cst_42 = arith.constant dense<0.000000e+00> : vector<16x256xf32>
    %48 = tpu.matmul %44, %47, %cst_42 {dimension_numbers = #tpu.dot_dimension_numbers<[1], [0], [0], [1], [0, 0, 1, 1], [], []>} : vector<16x128xbf16>, vector<128x256xbf16>, vector<16x256xf32> -> vector<16x256xf32>
    %49 = arith.truncf %48 : vector<16x256xf32> to vector<16x256xbf16>
    %c128_43 = arith.constant 128 : index
    %c256_44 = arith.constant 256 : index
    %50 = vector.load %arg4[%c128_43, %c256_44] : memref<256x896xbf16, #tpu.memory_space<vmem>>, vector<128x384xbf16>
    %cst_45 = arith.constant dense<0.000000e+00> : vector<16x384xf32>
    %51 = tpu.matmul %45, %50, %cst_45 {dimension_numbers = #tpu.dot_dimension_numbers<[1], [0], [0], [1], [0, 0, 1, 1], [], []>} : vector<16x128xbf16>, vector<128x384xbf16>, vector<16x384xf32> -> vector<16x384xf32>
    %52 = arith.truncf %51 : vector<16x384xf32> to vector<16x384xbf16>
    %c128_46 = arith.constant 128 : index
    %c640_47 = arith.constant 640 : index
    %53 = vector.load %arg4[%c128_46, %c640_47] : memref<256x896xbf16, #tpu.memory_space<vmem>>, vector<128x256xbf16>
    %cst_48 = arith.constant dense<0.000000e+00> : vector<16x256xf32>
    %54 = tpu.matmul %46, %53, %cst_48 {dimension_numbers = #tpu.dot_dimension_numbers<[1], [0], [0], [1], [0, 0, 1, 1], [], []>} : vector<16x128xbf16>, vector<128x256xbf16>, vector<16x256xf32> -> vector<16x256xf32>
    %55 = arith.truncf %54 : vector<16x256xf32> to vector<16x256xbf16>
    %56 = vector.extract_strided_slice %49 {offsets = [0, 0], sizes = [16, 128], strides = [1, 1]} : vector<16x256xbf16> to vector<16x128xbf16>
    %c0_49 = arith.constant 0 : index
    %c0_50 = arith.constant 0 : index
    %57 = vector.load %arg6[%c0_49, %c0_50] : memref<32x128xbf16, #tpu.memory_space<vmem>>, vector<16x128xbf16>
    tpu.vector_store %arg6[%c0_49, %c0_50], %56 {strides = array<i32>} : memref<32x128xbf16, #tpu.memory_space<vmem>>, vector<16x128xbf16>,
    %58 = vector.extract_strided_slice %52 {offsets = [0, 0], sizes = [16, 128], strides = [1, 1]} : vector<16x384xbf16> to vector<16x128xbf16>
    %c16_51 = arith.constant 16 : index
    %c0_52 = arith.constant 0 : index
    %59 = vector.load %arg6[%c16_51, %c0_52] : memref<32x128xbf16, #tpu.memory_space<vmem>>, vector<16x128xbf16>
    tpu.vector_store %arg6[%c16_51, %c0_52], %58 {strides = array<i32>} : memref<32x128xbf16, #tpu.memory_space<vmem>>, vector<16x128xbf16>,
    %60 = vector.extract_strided_slice %49 {offsets = [0, 128], sizes = [16, 128], strides = [1, 1]} : vector<16x256xbf16> to vector<16x128xbf16>
    %c0_53 = arith.constant 0 : index
    %c0_54 = arith.constant 0 : index
    %61 = vector.load %arg7[%c0_53, %c0_54] : memref<48x128xbf16, #tpu.memory_space<vmem>>, vector<16x128xbf16>
    tpu.vector_store %arg7[%c0_53, %c0_54], %60 {strides = array<i32>} : memref<48x128xbf16, #tpu.memory_space<vmem>>, vector<16x128xbf16>,
    %62 = vector.extract_strided_slice %52 {offsets = [0, 128], sizes = [16, 128], strides = [1, 1]} : vector<16x384xbf16> to vector<16x128xbf16>
    %c16_55 = arith.constant 16 : index
    %c0_56 = arith.constant 0 : index
    %63 = vector.load %arg7[%c16_55, %c0_56] : memref<48x128xbf16, #tpu.memory_space<vmem>>, vector<16x128xbf16>
    tpu.vector_store %arg7[%c16_55, %c0_56], %62 {strides = array<i32>} : memref<48x128xbf16, #tpu.memory_space<vmem>>, vector<16x128xbf16>,
    %64 = vector.extract_strided_slice %55 {offsets = [0, 0], sizes = [16, 128], strides = [1, 1]} : vector<16x256xbf16> to vector<16x128xbf16>
    %c32_57 = arith.constant 32 : index
    %c0_58 = arith.constant 0 : index
    %65 = vector.load %arg7[%c32_57, %c0_58] : memref<48x128xbf16, #tpu.memory_space<vmem>>, vector<16x128xbf16>
    tpu.vector_store %arg7[%c32_57, %c0_58], %64 {strides = array<i32>} : memref<48x128xbf16, #tpu.memory_space<vmem>>, vector<16x128xbf16>,
    %66 = vector.extract_strided_slice %52 {offsets = [0, 256], sizes = [16, 128], strides = [1, 1]} : vector<16x384xbf16> to vector<16x128xbf16>
    %c0_59 = arith.constant 0 : index
    %c0_60 = arith.constant 0 : index
    %67 = vector.load %arg8[%c0_59, %c0_60] : memref<32x128xbf16, #tpu.memory_space<vmem>>, vector<16x128xbf16>
    tpu.vector_store %arg8[%c0_59, %c0_60], %66 {strides = array<i32>} : memref<32x128xbf16, #tpu.memory_space<vmem>>, vector<16x128xbf16>,
    %68 = vector.extract_strided_slice %55 {offsets = [0, 128], sizes = [16, 128], strides = [1, 1]} : vector<16x256xbf16> to vector<16x128xbf16>
    %c16_61 = arith.constant 16 : index
    %c0_62 = arith.constant 0 : index
    %69 = vector.load %arg8[%c16_61, %c0_62] : memref<32x128xbf16, #tpu.memory_space<vmem>>, vector<16x128xbf16>
    tpu.vector_store %arg8[%c16_61, %c0_62], %68 {strides = array<i32>} : memref<32x128xbf16, #tpu.memory_space<vmem>>, vector<16x128xbf16>,
    %c0_63 = arith.constant 0 : index
    %c0_64 = arith.constant 0 : index
    %70 = vector.load %arg1[%c0_63, %c0_64] : memref<16x32xbf16, #tpu.memory_space<vmem>>, vector<16x32xbf16>
    %c0_65 = arith.constant 0 : index
    %c0_66 = arith.constant 0 : index
    %71 = vector.load %arg6[%c0_65, %c0_66] : memref<32x128xbf16, #tpu.memory_space<vmem>>, vector<32x128xbf16>
    %cst_67 = arith.constant dense<0.000000e+00> : vector<16x128xf32>
    %72 = tpu.matmul %70, %71, %cst_67 {dimension_numbers = #tpu.dot_dimension_numbers<[1], [0], [0], [1], [0, 0, 1, 1], [], []>} : vector<16x32xbf16>, vector<32x128xbf16>, vector<16x128xf32> -> vector<16x128xf32>
    %cst_68 = arith.constant 0.00999999977 : f32
    %73 = vector.broadcast %cst_68 : f32 to vector<16x128xf32>
    %74 = arith.mulf %73, %72 : vector<16x128xf32>
    %75 = arith.maximumf %72, %74 : vector<16x128xf32>
    %c0_69 = arith.constant 0 : index
    %c0_70 = arith.constant 0 : index
    %76 = vector.load %arg2[%c0_69, %c0_70] : memref<16x48xbf16, #tpu.memory_space<vmem>>, vector<16x48xbf16>
    %c0_71 = arith.constant 0 : index
    %c0_72 = arith.constant 0 : index
    %77 = vector.load %arg7[%c0_71, %c0_72] : memref<48x128xbf16, #tpu.memory_space<vmem>>, vector<48x128xbf16>
    %cst_73 = arith.constant dense<0.000000e+00> : vector<16x128xf32>
    %78 = tpu.matmul %76, %77, %cst_73 {dimension_numbers = #tpu.dot_dimension_numbers<[1], [0], [0], [1], [0, 0, 1, 1], [], []>} : vector<16x48xbf16>, vector<48x128xbf16>, vector<16x128xf32> -> vector<16x128xf32>
    %cst_74 = arith.constant 0.00999999977 : f32
    %79 = vector.broadcast %cst_74 : f32 to vector<16x128xf32>
    %80 = arith.mulf %79, %78 : vector<16x128xf32>
    %81 = arith.maximumf %78, %80 : vector<16x128xf32>
    %c0_75 = arith.constant 0 : index
    %c0_76 = arith.constant 0 : index
    %82 = vector.load %arg3[%c0_75, %c0_76] : memref<16x32xbf16, #tpu.memory_space<vmem>>, vector<16x32xbf16>
    %c0_77 = arith.constant 0 : index
    %c0_78 = arith.constant 0 : index
    %83 = vector.load %arg8[%c0_77, %c0_78] : memref<32x128xbf16, #tpu.memory_space<vmem>>, vector<32x128xbf16>
    %cst_79 = arith.constant dense<0.000000e+00> : vector<16x128xf32>
    %84 = tpu.matmul %82, %83, %cst_79 {dimension_numbers = #tpu.dot_dimension_numbers<[1], [0], [0], [1], [0, 0, 1, 1], [], []>} : vector<16x32xbf16>, vector<32x128xbf16>, vector<16x128xf32> -> vector<16x128xf32>
    %cst_80 = arith.constant 0.00999999977 : f32
    %85 = vector.broadcast %cst_80 : f32 to vector<16x128xf32>
    %86 = arith.mulf %85, %84 : vector<16x128xf32>
    %87 = arith.maximumf %84, %86 : vector<16x128xf32>
    %c0_81 = arith.constant 0 : index
    %c0_82 = arith.constant 0 : index
    %88 = vector.load %arg5[%c0_81, %c0_82] : memref<48x128xf32, #tpu.memory_space<vmem>>, vector<16x128xf32>
    tpu.vector_store %arg5[%c0_81, %c0_82], %75 {strides = array<i32>} : memref<48x128xf32, #tpu.memory_space<vmem>>, vector<16x128xf32>,
    %c16_83 = arith.constant 16 : index
    %c0_84 = arith.constant 0 : index
    %89 = vector.load %arg5[%c16_83, %c0_84] : memref<48x128xf32, #tpu.memory_space<vmem>>, vector<16x128xf32>
    tpu.vector_store %arg5[%c16_83, %c0_84], %81 {strides = array<i32>} : memref<48x128xf32, #tpu.memory_space<vmem>>, vector<16x128xf32>,
    %c32_85 = arith.constant 32 : index
    %c0_86 = arith.constant 0 : index
    %90 = vector.load %arg5[%c32_85, %c0_86] : memref<48x128xf32, #tpu.memory_space<vmem>>, vector<16x128xf32>
    tpu.vector_store %arg5[%c32_85, %c0_86], %87 {strides = array<i32>} : memref<48x128xf32, #tpu.memory_space<vmem>>, vector<16x128xf32>,
    return
  }
}

</mosaic_0001>

<llo_original>
// kernel: tpu_custom_call.1
$region0: #{tpu_custom_call.1}
  #allocation0 [shape = 'u32[]', space=smem, size = 0x4, offset = 0x4, fixed_abs, tag = 'smem constant byte address 0x4 - core index']
  #allocation1 [shape = 'u32[72,128]{1,0:T(1,128)}', space=vmem, size = 0x9000, scoped, tag = 'internal scratch']
  #allocation2 [shape = 'bf16[32,128]{1,0:T(8,128)(2,1)}', space=vmem, size = 0x2000, scoped, tag = 'scratch operand']
  #allocation3 [shape = 'bf16[48,128]{1,0:T(8,128)(2,1)}', space=vmem, size = 0x3000, scoped, tag = 'scratch operand']
  #allocation4 [shape = 'bf16[32,128]{1,0:T(8,128)(2,1)}', space=vmem, size = 0x2000, scoped, tag = 'scratch operand']
  %s0 = inlined_call_operand.hbm [shape: bf16[48,128], index: 0, kind: input, shape index: {}]
  %s1 = inlined_call_operand.hbm [shape: bf16[16,32], index: 1, kind: input, shape index: {}]
  %s2 = inlined_call_operand.hbm [shape: bf16[16,48], index: 2, kind: input, shape index: {}]
  %s3 = inlined_call_operand.hbm [shape: bf16[16,32], index: 3, kind: input, shape index: {}]
  %s4 = inlined_call_operand.hbm [shape: bf16[256,896], index: 4, kind: input, shape index: {}]
  %s5 = inlined_call_operand.hbm [shape: f32[48,128], index: 5, kind: output, shape index: {}]
  %s6 = sld [smem:[#allocation0]]
  $region50: #{tpu_custom_call.1} parent=0
    _
  %s8 = ssub.s32 1, %s6
  %s9 = scalar_select 0, %s8, %s6
  $region1: #{tpu_custom_call.1} parent=0
    #allocation5 [shape = 'u8[12288]{0}', space=vmem, size = 0x3000, scoped, tag = 'input window, operand 0, single buffered']
    #allocation6 [shape = 's32[1]{0}', space=sflag, size = 0x4, scoped, tag = 'scoped memory for tpu_custom_call.1']
    #allocation7 [shape = 's32[1]{0}', space=sflag, size = 0x4, scoped, tag = 'scoped memory for tpu_custom_call.1']
    #allocation8 [shape = 'u8[4096]{0}', space=vmem, size = 0x1000, scoped, tag = 'input window, operand 1, single buffered']
    #allocation9 [shape = 's32[1]{0}', space=sflag, size = 0x4, scoped, tag = 'scoped memory for tpu_custom_call.1']
    #allocation10 [shape = 'u8[4096]{0}', space=vmem, size = 0x1000, scoped, tag = 'input window, operand 2, single buffered']
    #allocation11 [shape = 'u8[4096]{0}', space=vmem, size = 0x1000, scoped, tag = 'input window, operand 3, single buffered']
    #allocation12 [shape = 's32[1]{0}', space=sflag, size = 0x4, scoped, tag = 'scoped memory for tpu_custom_call.1']
    #allocation13 [shape = 'u8[458752]{0}', space=vmem, size = 0x70000, scoped, tag = 'input window, operand 4, single buffered']
    #allocation14 [shape = 'u8[24576]{0}', space=vmem, size = 0x6000, scoped, tag = 'output window, operand 0, single buffered']
    %10 = vsyncpa [#allocation6], 0
    %11 = vsyncpa [#allocation9], 0
    %12 = vsyncpa [#allocation12], 0
    %13 = vsyncpa [#allocation7], 0
    // Predicated region
    $region2: #{tpu_custom_call.1} parent=1 // pred_check
      _
    $region3: #{tpu_custom_call.1} parent=1 // pred_check_branch
      %15 = sbr.rel (0) target = $region5
    $region4: #{tpu_custom_call.1} parent=1 // pred_region
      %17 = vsyncadd [#allocation6], 0
      %s18 = sshll.u32 %s0, 4
      %s19 = int_to_ptr.hbm [resolvable:$true] %s18
      %s20 = sshll.u32 [#allocation5], 4
      %s21 = int_to_ptr.vmem [resolvable:$true] %s20
      %26 = dma.hbm_to_vmem [thread:$0]  %s19, 384, %s21, [#allocation6], 64, 64, 4
    $region5: #{tpu_custom_call.1} parent=1 // pred_fallthru
      _
    // Predicated region
    $region6: #{tpu_custom_call.1} parent=1 // pred_check
      _
    $region7: #{tpu_custom_call.1} parent=1 // pred_check_branch
      %28 = sbr.rel (0) target = $region9
    $region8: #{tpu_custom_call.1} parent=1 // pred_region
      %30 = vsyncadd [#allocation9], 0
      %s31 = sshll.u32 %s1, 4
      %s32 = int_to_ptr.hbm [resolvable:$true] %s31
      %s33 = sshll.u32 [#allocation8], 4
      %s34 = int_to_ptr.vmem [resolvable:$true] %s33
      %39 = dma.hbm_to_vmem [thread:$0]  %s32, 128, %s34, [#allocation9], 64, 64, 4
    $region9: #{tpu_custom_call.1} parent=1 // pred_fallthru
      _
    // Predicated region
    $region10: #{tpu_custom_call.1} parent=1 // pred_check
      _
    $region11: #{tpu_custom_call.1} parent=1 // pred_check_branch
      %41 = sbr.rel (0) target = $region13
    $region12: #{tpu_custom_call.1} parent=1 // pred_region
      %43 = vsyncadd [#allocation9], 0
      %s44 = sshll.u32 %s2, 4
      %s45 = int_to_ptr.hbm [resolvable:$true] %s44
      %s46 = sshll.u32 [#allocation10], 4
      %s47 = int_to_ptr.vmem [resolvable:$true] %s46
      %52 = dma.hbm_to_vmem [thread:$0]  %s45, 128, %s47, [#allocation9], 64, 64, 4
    $region13: #{tpu_custom_call.1} parent=1 // pred_fallthru
      _
    // Predicated region
    $region14: #{tpu_custom_call.1} parent=1 // pred_check
      _
    $region15: #{tpu_custom_call.1} parent=1 // pred_check_branch
      %54 = sbr.rel (0) target = $region17
    $region16: #{tpu_custom_call.1} parent=1 // pred_region
      %56 = vsyncadd [#allocation12], 0
      %s57 = sshll.u32 %s3, 4
      %s58 = int_to_ptr.hbm [resolvable:$true] %s57
      %s59 = sshll.u32 [#allocation11], 4
      %s60 = int_to_ptr.vmem [resolvable:$true] %s59
      %65 = dma.hbm_to_vmem [thread:$0]  %s58, 128, %s60, [#allocation12], 64, 64, 4
    $region17: #{tpu_custom_call.1} parent=1 // pred_fallthru
      _
    // Predicated region
    $region18: #{tpu_custom_call.1} parent=1 // pred_check
      _
    $region19: #{tpu_custom_call.1} parent=1 // pred_check_branch
      %67 = sbr.rel (0) target = $region21
    $region20: #{tpu_custom_call.1} parent=1 // pred_region
      %69 = vsyncadd [#allocation12], 0
      %s70 = sshll.u32 %s4, 4
      %s71 = int_to_ptr.hbm [resolvable:$true] %s70
      %s72 = sshll.u32 [#allocation13], 4
      %s73 = int_to_ptr.vmem [resolvable:$true] %s72
      %78 = dma.hbm_to_vmem [thread:$0]  %s71, 14336, %s73, [#allocation12], 448, 448, 28
    $region21: #{tpu_custom_call.1} parent=1 // pred_fallthru
      _
    // Predicated region
    $region22: #{tpu_custom_call.1} parent=1 // pred_check
      _
    $region23: #{tpu_custom_call.1} parent=1 // pred_check_branch
      %80 = sbr.rel (0) target = $region25
    $region24: #{tpu_custom_call.1} parent=1 // pred_region
      %82 = dma.done [#allocation6], 384
    $region25: #{tpu_custom_call.1} parent=1 // pred_fallthru
      _
    // Predicated region
    $region26: #{tpu_custom_call.1} parent=1 // pred_check
      _
    $region27: #{tpu_custom_call.1} parent=1 // pred_check_branch
      %84 = sbr.rel (0) target = $region29
    $region28: #{tpu_custom_call.1} parent=1 // pred_region
      %86 = dma.done [#allocation9], 128
    $region29: #{tpu_custom_call.1} parent=1 // pred_fallthru
      _
    // Predicated region
    $region30: #{tpu_custom_call.1} parent=1 // pred_check
      _
    $region31: #{tpu_custom_call.1} parent=1 // pred_check_branch
      %88 = sbr.rel (0) target = $region33
    $region32: #{tpu_custom_call.1} parent=1 // pred_region
      %90 = dma.done [#allocation9], 128
    $region33: #{tpu_custom_call.1} parent=1 // pred_fallthru
      _
    // Predicated region
    $region34: #{tpu_custom_call.1} parent=1 // pred_check
      _
    $region35: #{tpu_custom_call.1} parent=1 // pred_check_branch
      %92 = sbr.rel (0) target = $region37
    $region36: #{tpu_custom_call.1} parent=1 // pred_region
      %94 = dma.done [#allocation12], 128
    $region37: #{tpu_custom_call.1} parent=1 // pred_fallthru
      _
    // Predicated region
    $region38: #{tpu_custom_call.1} parent=1 // pred_check
      _
    $region39: #{tpu_custom_call.1} parent=1 // pred_check_branch
      %96 = sbr.rel (0) target = $region41
    $region40: #{tpu_custom_call.1} parent=1 // pred_region
      %98 = dma.done [#allocation12], 14336
    $region41: #{tpu_custom_call.1} parent=1 // pred_fallthru
      _
    %v100 = vld [vmem:[#allocation5] sm:$0xf]
    %v101 = vld [vmem:[#allocation5 + $0x4] sm:$0xf]
    %v102 = vld [vmem:[#allocation5 + $0x8] sm:$0xf]
    %v103 = vld [vmem:[#allocation5 + $0xc] sm:$0xf]
    %v104 = vld [vmem:[#allocation5 + $0x10] sm:$0xf]
    %v105 = vld [vmem:[#allocation5 + $0x14] sm:$0xf]
    %v106 = vld [vmem:[#allocation13] sm:$0xff]
    %v107 = vld [vmem:[#allocation13 + $0x1c] sm:$0xff]
    %v108 = vld [vmem:[#allocation13 + $0x38] sm:$0xff]
    %v109 = vld [vmem:[#allocation13 + $0x54] sm:$0xff]
    %v110 = vld [vmem:[#allocation13 + $0x70] sm:$0xff]
    %v111 = vld [vmem:[#allocation13 + $0x8c] sm:$0xff]
    %v112 = vld [vmem:[#allocation13 + $0xa8] sm:$0xff]
    %v113 = vld [vmem:[#allocation13 + $0xc4] sm:$0xff]
    %v114 = vld [vmem:[#allocation13 + $0xe0] sm:$0xff]
    %v115 = vld [vmem:[#allocation13 + $0xfc] sm:$0xff]
    %v116 = vld [vmem:[#allocation13 + $0x118] sm:$0xff]
    %v117 = vld [vmem:[#allocation13 + $0x134] sm:$0xff]
    %v118 = vld [vmem:[#allocation13 + $0x150] sm:$0xff]
    %v119 = vld [vmem:[#allocation13 + $0x16c] sm:$0xff]
    %v120 = vld [vmem:[#allocation13 + $0x188] sm:$0xff]
    %v121 = vld [vmem:[#allocation13 + $0x1a4] sm:$0xff]
    %v124 = vunpack.c.l.b16 %v100
    %v125 = vunpack.c.l.b16 %v101
    %v126 = vpack.c.b16 %v125, %v124
    %v144 = vunpack.c.l.b16 %v106
    %v145 = vunpack.c.h.b16 %v106
    %v146 = vunpack.c.l.b16 %v107
    %v147 = vunpack.c.h.b16 %v107
    %v148 = vunpack.c.l.b16 %v108
    %v149 = vunpack.c.h.b16 %v108
    %v150 = vunpack.c.l.b16 %v109
    %v151 = vunpack.c.h.b16 %v109
    %v152 = vunpack.c.l.b16 %v110
    %v153 = vunpack.c.h.b16 %v110
    %v154 = vunpack.c.l.b16 %v111
    %v155 = vunpack.c.h.b16 %v111
    %v156 = vunpack.c.l.b16 %v112
    %v157 = vunpack.c.h.b16 %v112
    %v158 = vunpack.c.l.b16 %v113
    %v159 = vunpack.c.h.b16 %v113
    %v160 = vunpack.c.l.b16 %v114
    %v161 = vunpack.c.h.b16 %v114
    %v162 = vunpack.c.l.b16 %v115
    %v163 = vunpack.c.h.b16 %v115
    %v164 = vunpack.c.l.b16 %v116
    %v165 = vunpack.c.h.b16 %v116
    %v166 = vunpack.c.l.b16 %v117
    %v167 = vunpack.c.h.b16 %v117
    %v168 = vunpack.c.l.b16 %v118
    %v169 = vunpack.c.h.b16 %v118
    %v170 = vunpack.c.l.b16 %v119
    %v171 = vunpack.c.h.b16 %v119
    %v172 = vunpack.c.l.b16 %v120
    %v173 = vunpack.c.h.b16 %v120
    %v174 = vunpack.c.l.b16 %v121
    %v175 = vunpack.c.h.b16 %v121
    %v176 = vpack.c.b16 %v146, %v144
    %v177 = vpack.c.b16 %v147, %v145
    %v178 = vpack.c.b16 %v150, %v148
    %v179 = vpack.c.b16 %v151, %v149
    %v180 = vpack.c.b16 %v154, %v152
    %v181 = vpack.c.b16 %v155, %v153
    %v182 = vpack.c.b16 %v158, %v156
    %v183 = vpack.c.b16 %v159, %v157
    %v184 = vpack.c.b16 %v162, %v160
    %v185 = vpack.c.b16 %v163, %v161
    %v186 = vpack.c.b16 %v166, %v164
    %v187 = vpack.c.b16 %v167, %v165
    %v188 = vpack.c.b16 %v170, %v168
    %v189 = vpack.c.b16 %v171, %v169
    %v190 = vpack.c.b16 %v174, %v172
    %v191 = vpack.c.b16 %v175, %v173
    %208 = vmatpush.bf16.msra.mxu0 %v190
    %209 = vmatpush.bf16.msra.mxu0 %v188
    %210 = vmatpush.bf16.msra.mxu0 %v186
    %211 = vmatpush.bf16.msra.mxu0 %v184
    %212 = vmatpush.bf16.msra.mxu0 %v182
    %213 = vmatpush.bf16.msra.mxu0 %v180
    %214 = vmatpush.bf16.msra.mxu0 %v178
    %215 = vmatpush.bf16.msra.mxu0 %v176
    %216 = vmatmul.bf16.gmra.mxu0 %v126
    %v217 = vpop.f32.mrf.mxu0
    %v218 = vadd.f32 0.0, %v217
    %v219 = vpop.f32.mrf.mxu0
    %v220 = vadd.f32 0.0, %v219
    %221 = vdwg.mxu0
    %222 = vmatpush.bf16.msra.mxu0 %v191
    %223 = vmatpush.bf16.msra.mxu0 %v189
    %224 = vmatpush.bf16.msra.mxu0 %v187
    %225 = vmatpush.bf16.msra.mxu0 %v185
    %226 = vmatpush.bf16.msra.mxu0 %v183
    %227 = vmatpush.bf16.msra.mxu0 %v181
    %228 = vmatpush.bf16.msra.mxu0 %v179
    %229 = vmatpush.bf16.msra.mxu0 %v177
    %230 = vmatmul.bf16.gmra.mxu0 %v126
    %v231 = vpop.f32.mrf.mxu0
    %v232 = vadd.f32 0.0, %v231
    %v233 = vpop.f32.mrf.mxu0
    %v234 = vadd.f32 0.0, %v233
    %235 = vdwg.mxu0
    %v236 = vpack.c.bf16 %v232, %v218
    %v237 = vpack.c.bf16 %v234, %v220
    %v238 = vld [vmem:[#allocation13 + $0x8] sm:$0xff]
    %v239 = vld [vmem:[#allocation13 + $0x10] sm:$0xf]
    %v240 = vld [vmem:[#allocation13 + $0x24] sm:$0xff]
    %v241 = vld [vmem:[#allocation13 + $0x2c] sm:$0xf]
    %v242 = vld [vmem:[#allocation13 + $0x40] sm:$0xff]
    %v243 = vld [vmem:[#allocation13 + $0x48] sm:$0xf]
    %v244 = vld [vmem:[#allocation13 + $0x5c] sm:$0xff]
    %v245 = vld [vmem:[#allocation13 + $0x64] sm:$0xf]
    %v246 = vld [vmem:[#allocation13 + $0x78] sm:$0xff]
    %v247 = vld [vmem:[#allocation13 + $0x80] sm:$0xf]
    %v248 = vld [vmem:[#allocation13 + $0x94] sm:$0xff]
    %v249 = vld [vmem:[#allocation13 + $0x9c] sm:$0xf]
    %v250 = vld [vmem:[#allocation13 + $0xb0] sm:$0xff]
    %v251 = vld [vmem:[#allocation13 + $0xb8] sm:$0xf]
    %v252 = vld [vmem:[#allocation13 + $0xcc] sm:$0xff]
    %v253 = vld [vmem:[#allocation13 + $0xd4] sm:$0xf]
    %v254 = vld [vmem:[#allocation13 + $0xe8] sm:$0xff]
    %v255 = vld [vmem:[#allocation13 + $0xf0] sm:$0xf]
    %v256 = vld [vmem:[#allocation13 + $0x104] sm:$0xff]
    %v257 = vld [vmem:[#allocation13 + $0x10c] sm:$0xf]
    %v258 = vld [vmem:[#allocation13 + $0x120] sm:$0xff]
    %v259 = vld [vmem:[#allocation13 + $0x128] sm:$0xf]
    %v260 = vld [vmem:[#allocation13 + $0x13c] sm:$0xff]
    %v261 = vld [vmem:[#allocation13 + $0x144] sm:$0xf]
    %v262 = vld [vmem:[#allocation13 + $0x158] sm:$0xff]
    %v263 = vld [vmem:[#allocation13 + $0x160] sm:$0xf]
    %v264 = vld [vmem:[#allocation13 + $0x174] sm:$0xff]
    %v265 = vld [vmem:[#allocation13 + $0x17c] sm:$0xf]
    %v266 = vld [vmem:[#allocation13 + $0x190] sm:$0xff]
    %v267 = vld [vmem:[#allocation13 + $0x198] sm:$0xf]
    %v268 = vld [vmem:[#allocation13 + $0x1ac] sm:$0xff]
    %v269 = vld [vmem:[#allocation13 + $0x1b4] sm:$0xf]
    %v272 = vunpack.c.l.b16 %v102
    %v273 = vunpack.c.l.b16 %v103
    %v274 = vpack.c.b16 %v273, %v272
    %v308 = vunpack.c.l.b16 %v238
    %v309 = vunpack.c.h.b16 %v238
    %v310 = vunpack.c.l.b16 %v239
    %v311 = vunpack.c.l.b16 %v240
    %v312 = vunpack.c.h.b16 %v240
    %v313 = vunpack.c.l.b16 %v241
    %v314 = vunpack.c.l.b16 %v242
    %v315 = vunpack.c.h.b16 %v242
    %v316 = vunpack.c.l.b16 %v243
    %v317 = vunpack.c.l.b16 %v244
    %v318 = vunpack.c.h.b16 %v244
    %v319 = vunpack.c.l.b16 %v245
    %v320 = vunpack.c.l.b16 %v246
    %v321 = vunpack.c.h.b16 %v246
    %v322 = vunpack.c.l.b16 %v247
    %v323 = vunpack.c.l.b16 %v248
    %v324 = vunpack.c.h.b16 %v248
    %v325 = vunpack.c.l.b16 %v249
    %v326 = vunpack.c.l.b16 %v250
    %v327 = vunpack.c.h.b16 %v250
    %v328 = vunpack.c.l.b16 %v251
    %v329 = vunpack.c.l.b16 %v252
    %v330 = vunpack.c.h.b16 %v252
    %v331 = vunpack.c.l.b16 %v253
    %v332 = vunpack.c.l.b16 %v254
    %v333 = vunpack.c.h.b16 %v254
    %v334 = vunpack.c.l.b16 %v255
    %v335 = vunpack.c.l.b16 %v256
    %v336 = vunpack.c.h.b16 %v256
    %v337 = vunpack.c.l.b16 %v257
    %v338 = vunpack.c.l.b16 %v258
    %v339 = vunpack.c.h.b16 %v258
    %v340 = vunpack.c.l.b16 %v259
    %v341 = vunpack.c.l.b16 %v260
    %v342 = vunpack.c.h.b16 %v260
    %v343 = vunpack.c.l.b16 %v261
    %v344 = vunpack.c.l.b16 %v262
    %v345 = vunpack.c.h.b16 %v262
    %v346 = vunpack.c.l.b16 %v263
    %v347 = vunpack.c.l.b16 %v264
    %v348 = vunpack.c.h.b16 %v264
    %v349 = vunpack.c.l.b16 %v265
    %v350 = vunpack.c.l.b16 %v266
    %v351 = vunpack.c.h.b16 %v266
    %v352 = vunpack.c.l.b16 %v267
    %v353 = vunpack.c.l.b16 %v268
    %v354 = vunpack.c.h.b16 %v268
    %v355 = vunpack.c.l.b16 %v269
    %v356 = vpack.c.b16 %v311, %v308
    %v357 = vpack.c.b16 %v312, %v309
    %v358 = vpack.c.b16 %v313, %v310
    %v359 = vpack.c.b16 %v317, %v314
    %v360 = vpack.c.b16 %v318, %v315
    %v361 = vpack.c.b16 %v319, %v316
    %v362 = vpack.c.b16 %v323, %v320
    %v363 = vpack.c.b16 %v324, %v321
    %v364 = vpack.c.b16 %v325, %v322
    %v365 = vpack.c.b16 %v329, %v326
    %v366 = vpack.c.b16 %v330, %v327
    %v367 = vpack.c.b16 %v331, %v328
    %v368 = vpack.c.b16 %v335, %v332
    %v369 = vpack.c.b16 %v336, %v333
    %v370 = vpack.c.b16 %v337, %v334
    %v371 = vpack.c.b16 %v341, %v338
    %v372 = vpack.c.b16 %v342, %v339
    %v373 = vpack.c.b16 %v343, %v340
    %v374 = vpack.c.b16 %v347, %v344
    %v375 = vpack.c.b16 %v348, %v345
    %v376 = vpack.c.b16 %v349, %v346
    %v377 = vpack.c.b16 %v353, %v350
    %v378 = vpack.c.b16 %v354, %v351
    %v379 = vpack.c.b16 %v355, %v352
    %404 = vmatpush.bf16.msra.mxu0 %v377
    %405 = vmatpush.bf16.msra.mxu0 %v374
    %406 = vmatpush.bf16.msra.mxu0 %v371
    %407 = vmatpush.bf16.msra.mxu0 %v368
    %408 = vmatpush.bf16.msra.mxu0 %v365
    %409 = vmatpush.bf16.msra.mxu0 %v362
    %410 = vmatpush.bf16.msra.mxu0 %v359
    %411 = vmatpush.bf16.msra.mxu0 %v356
    %412 = vmatmul.bf16.gmra.mxu0 %v274
    %v413 = vpop.f32.mrf.mxu0
    %v414 = vadd.f32 0.0, %v413
    %v415 = vpop.f32.mrf.mxu0
    %v416 = vadd.f32 0.0, %v415
    %417 = vdwg.mxu0
    %418 = vmatpush.bf16.msra.mxu0 %v378
    %419 = vmatpush.bf16.msra.mxu0 %v375
    %420 = vmatpush.bf16.msra.mxu0 %v372
    %421 = vmatpush.bf16.msra.mxu0 %v369
    %422 = vmatpush.bf16.msra.mxu0 %v366
    %423 = vmatpush.bf16.msra.mxu0 %v363
    %424 = vmatpush.bf16.msra.mxu0 %v360
    %425 = vmatpush.bf16.msra.mxu0 %v357
    %426 = vmatmul.bf16.gmra.mxu0 %v274
    %v427 = vpop.f32.mrf.mxu0
    %v428 = vadd.f32 0.0, %v427
    %v429 = vpop.f32.mrf.mxu0
    %v430 = vadd.f32 0.0, %v429
    %431 = vdwg.mxu0
    %432 = vmatpush.bf16.msra.mxu0 %v379
    %433 = vmatpush.bf16.msra.mxu0 %v376
    %434 = vmatpush.bf16.msra.mxu0 %v373
    %435 = vmatpush.bf16.msra.mxu0 %v370
    %436 = vmatpush.bf16.msra.mxu0 %v367
    %437 = vmatpush.bf16.msra.mxu0 %v364
    %438 = vmatpush.bf16.msra.mxu0 %v361
    %439 = vmatpush.bf16.msra.mxu0 %v358
    %440 = vmatmul.bf16.gmra.mxu0 %v274
    %v441 = vpop.f32.mrf.mxu0
    %v442 = vadd.f32 0.0, %v441
    %v443 = vpop.f32.mrf.mxu0
    %v444 = vadd.f32 0.0, %v443
    %445 = vdwg.mxu0
    %v446 = vpack.c.bf16 %v428, %v414
    %v447 = vpack.c.bf16 %v442, %v442
    %v448 = vpack.c.bf16 %v430, %v416
    %v449 = vpack.c.bf16 %v444, %v444
    %v450 = vld [vmem:[#allocation13 + $0x14] sm:$0xff]
    %v451 = vld [vmem:[#allocation13 + $0x30] sm:$0xff]
    %v452 = vld [vmem:[#allocation13 + $0x4c] sm:$0xff]
    %v453 = vld [vmem:[#allocation13 + $0x68] sm:$0xff]
    %v454 = vld [vmem:[#allocation13 + $0x84] sm:$0xff]
    %v455 = vld [vmem:[#allocation13 + $0xa0] sm:$0xff]
    %v456 = vld [vmem:[#allocation13 + $0xbc] sm:$0xff]
    %v457 = vld [vmem:[#allocation13 + $0xd8] sm:$0xff]
    %v458 = vld [vmem:[#allocation13 + $0xf4] sm:$0xff]
    %v459 = vld [vmem:[#allocation13 + $0x110] sm:$0xff]
    %v460 = vld [vmem:[#allocation13 + $0x12c] sm:$0xff]
    %v461 = vld [vmem:[#allocation13 + $0x148] sm:$0xff]
    %v462 = vld [vmem:[#allocation13 + $0x164] sm:$0xff]
    %v463 = vld [vmem:[#allocation13 + $0x180] sm:$0xff]
    %v464 = vld [vmem:[#allocation13 + $0x19c] sm:$0xff]
    %v465 = vld [vmem:[#allocation13 + $0x1b8] sm:$0xff]
    %v468 = vunpack.c.l.b16 %v104
    %v469 = vunpack.c.l.b16 %v105
    %v470 = vpack.c.b16 %v469, %v468
    %v488 = vunpack.c.l.b16 %v450
    %v489 = vunpack.c.h.b16 %v450
    %v490 = vunpack.c.l.b16 %v451
    %v491 = vunpack.c.h.b16 %v451
    %v492 = vunpack.c.l.b16 %v452
    %v493 = vunpack.c.h.b16 %v452
    %v494 = vunpack.c.l.b16 %v453
    %v495 = vunpack.c.h.b16 %v453
    %v496 = vunpack.c.l.b16 %v454
    %v497 = vunpack.c.h.b16 %v454
    %v498 = vunpack.c.l.b16 %v455
    %v499 = vunpack.c.h.b16 %v455
    %v500 = vunpack.c.l.b16 %v456
    %v501 = vunpack.c.h.b16 %v456
    %v502 = vunpack.c.l.b16 %v457
    %v503 = vunpack.c.h.b16 %v457
    %v504 = vunpack.c.l.b16 %v458
    %v505 = vunpack.c.h.b16 %v458
    %v506 = vunpack.c.l.b16 %v459
    %v507 = vunpack.c.h.b16 %v459
    %v508 = vunpack.c.l.b16 %v460
    %v509 = vunpack.c.h.b16 %v460
    %v510 = vunpack.c.l.b16 %v461
    %v511 = vunpack.c.h.b16 %v461
    %v512 = vunpack.c.l.b16 %v462
    %v513 = vunpack.c.h.b16 %v462
    %v514 = vunpack.c.l.b16 %v463
    %v515 = vunpack.c.h.b16 %v463
    %v516 = vunpack.c.l.b16 %v464
    %v517 = vunpack.c.h.b16 %v464
    %v518 = vunpack.c.l.b16 %v465
    %v519 = vunpack.c.h.b16 %v465
    %v520 = vpack.c.b16 %v490, %v488
    %v521 = vpack.c.b16 %v491, %v489
    %v522 = vpack.c.b16 %v494, %v492
    %v523 = vpack.c.b16 %v495, %v493
    %v524 = vpack.c.b16 %v498, %v496
    %v525 = vpack.c.b16 %v499, %v497
    %v526 = vpack.c.b16 %v502, %v500
    %v527 = vpack.c.b16 %v503, %v501
    %v528 = vpack.c.b16 %v506, %v504
    %v529 = vpack.c.b16 %v507, %v505
    %v530 = vpack.c.b16 %v510, %v508
    %v531 = vpack.c.b16 %v511, %v509
    %v532 = vpack.c.b16 %v514, %v512
    %v533 = vpack.c.b16 %v515, %v513
    %v534 = vpack.c.b16 %v518, %v516
    %v535 = vpack.c.b16 %v519, %v517
    %552 = vmatpush.bf16.msra.mxu0 %v534
    %553 = vmatpush.bf16.msra.mxu0 %v532
    %554 = vmatpush.bf16.msra.mxu0 %v530
    %555 = vmatpush.bf16.msra.mxu0 %v528
    %556 = vmatpush.bf16.msra.mxu0 %v526
    %557 = vmatpush.bf16.msra.mxu0 %v524
    %558 = vmatpush.bf16.msra.mxu0 %v522
    %559 = vmatpush.bf16.msra.mxu0 %v520
    %560 = vmatmul.bf16.gmra.mxu0 %v470
    %v561 = vpop.f32.mrf.mxu0
    %v562 = vadd.f32 0.0, %v561
    %v563 = vpop.f32.mrf.mxu0
    %v564 = vadd.f32 0.0, %v563
    %565 = vdwg.mxu0
    %566 = vmatpush.bf16.msra.mxu0 %v535
    %567 = vmatpush.bf16.msra.mxu0 %v533
    %568 = vmatpush.bf16.msra.mxu0 %v531
    %569 = vmatpush.bf16.msra.mxu0 %v529
    %570 = vmatpush.bf16.msra.mxu0 %v527
    %571 = vmatpush.bf16.msra.mxu0 %v525
    %572 = vmatpush.bf16.msra.mxu0 %v523
    %573 = vmatpush.bf16.msra.mxu0 %v521
    %574 = vmatmul.bf16.gmra.mxu0 %v470
    %v575 = vpop.f32.mrf.mxu0
    %v576 = vadd.f32 0.0, %v575
    %v577 = vpop.f32.mrf.mxu0
    %v578 = vadd.f32 0.0, %v577
    %579 = vdwg.mxu0
    %v580 = vpack.c.bf16 %v576, %v562
    %v581 = vpack.c.bf16 %v578, %v564
    %582 = vst [vmem:[#allocation2] sm:$0xf] %v236
    %583 = vst [vmem:[#allocation2 + $0x4] sm:$0xf] %v237
    %584 = vst [vmem:[#allocation2 + $0x8] sm:$0xf] %v446
    %585 = vst [vmem:[#allocation2 + $0xc] sm:$0xf] %v448
    %v588 = vrot.slane %v236, 4
    %v589 = vrot.slane %v237, 4
    %592 = vst [vmem:[#allocation3] sm:$0xf] %v588
    %593 = vst [vmem:[#allocation3 + $0x4] sm:$0xf] %v589
    %v596 = vrot.slane %v446, 4
    %v597 = vrot.slane %v448, 4
    %600 = vst [vmem:[#allocation3 + $0x8] sm:$0xf] %v596
    %601 = vst [vmem:[#allocation3 + $0xc] sm:$0xf] %v597
    %602 = vst [vmem:[#allocation3 + $0x10] sm:$0xf] %v580
    %603 = vst [vmem:[#allocation3 + $0x14] sm:$0xf] %v581
    %604 = vst [vmem:[#allocation4] sm:$0xf] %v447
    %605 = vst [vmem:[#allocation4 + $0x4] sm:$0xf] %v449
    %v608 = vrot.slane %v580, 4
    %v609 = vrot.slane %v581, 4
    %612 = vst [vmem:[#allocation4 + $0x8] sm:$0xf] %v608
    %613 = vst [vmem:[#allocation4 + $0xc] sm:$0xf] %v609
    %v614 = vld [vmem:[#allocation8] sm:$0xf]
    %v615 = vld [vmem:[#allocation8 + $0x4] sm:$0xf]
    %v616 = vld [vmem:[#allocation2] sm:$0xf]
    %v617 = vld [vmem:[#allocation2 + $0x4] sm:$0xf]
    %v618 = vld [vmem:[#allocation2 + $0x8] sm:$0xf]
    %v619 = vld [vmem:[#allocation2 + $0xc] sm:$0xf]
    %v622 = vunpack.c.l.b16 %v614
    %v623 = vunpack.c.l.b16 %v615
    %v624 = vpack.c.b16 %v623, %v622
    %v629 = vunpack.c.l.b16 %v616
    %v630 = vunpack.c.l.b16 %v617
    %v631 = vunpack.c.l.b16 %v618
    %v632 = vunpack.c.l.b16 %v619
    %v633 = vpack.c.b16 %v630, %v629
    %v634 = vpack.c.b16 %v632, %v631
    %vm637 = vcmask 261120
    %v639 = vsel %vm637, %v624, 0
    %641 = vmatpush.bf16.msra.mxu0 0
    %642 = vmatpush.bf16.msra.mxu0 0
    %643 = vmatpush.bf16.msra.mxu0 0
    %644 = vmatpush.bf16.msra.mxu0 0
    %645 = vmatpush.bf16.msra.mxu0 0
    %646 = vmatpush.bf16.msra.mxu0 0
    %647 = vmatpush.bf16.msra.mxu0 %v634
    %648 = vmatpush.bf16.msra.mxu0 %v633
    %649 = vmatmul.bf16.gmra.mxu0 %v639
    %v650 = vpop.f32.mrf.mxu0
    %v651 = vadd.f32 0.0, %v650
    %v652 = vpop.f32.mrf.mxu0
    %v653 = vadd.f32 0.0, %v652
    %654 = vdwg.mxu0
    %v655 = vmul.f32 %v651, 0.01
    %v656 = vmul.f32 %v653, 0.01
    %v657 = vmax.f32 %v651, %v655
    %v658 = vmax.f32 %v653, %v656
    %v659 = vld [vmem:[#allocation10] sm:$0xf]
    %v660 = vld [vmem:[#allocation10 + $0x4] sm:$0xf]
    %v661 = vld [vmem:[#allocation3] sm:$0xf]
    %v662 = vld [vmem:[#allocation3 + $0x4] sm:$0xf]
    %v663 = vld [vmem:[#allocation3 + $0x8] sm:$0xf]
    %v664 = vld [vmem:[#allocation3 + $0xc] sm:$0xf]
    %v665 = vld [vmem:[#allocation3 + $0x10] sm:$0xf]
    %v666 = vld [vmem:[#allocation3 + $0x14] sm:$0xf]
    %v669 = vunpack.c.l.b16 %v659
    %v670 = vunpack.c.l.b16 %v660
    %v671 = vpack.c.b16 %v670, %v669
    %v678 = vunpack.c.l.b16 %v661
    %v679 = vunpack.c.l.b16 %v662
    %v680 = vunpack.c.l.b16 %v663
    %v681 = vunpack.c.l.b16 %v664
    %v682 = vunpack.c.l.b16 %v665
    %v683 = vunpack.c.l.b16 %v666
    %v684 = vpack.c.b16 %v679, %v678
    %v685 = vpack.c.b16 %v681, %v680
    %v686 = vpack.c.b16 %v683, %v682
    %vm690 = vcmask 392192
    %v692 = vsel %vm690, %v671, 0
    %694 = vmatpush.bf16.msra.mxu0 0
    %695 = vmatpush.bf16.msra.mxu0 0
    %696 = vmatpush.bf16.msra.mxu0 0
    %697 = vmatpush.bf16.msra.mxu0 0
    %698 = vmatpush.bf16.msra.mxu0 0
    %699 = vmatpush.bf16.msra.mxu0 %v686
    %700 = vmatpush.bf16.msra.mxu0 %v685
    %701 = vmatpush.bf16.msra.mxu0 %v684
    %702 = vmatmul.bf16.gmra.mxu0 %v692
    %v703 = vpop.f32.mrf.mxu0
    %v704 = vadd.f32 0.0, %v703
    %v705 = vpop.f32.mrf.mxu0
    %v706 = vadd.f32 0.0, %v705
    %707 = vdwg.mxu0
    %v708 = vmul.f32 %v704, 0.01
    %v709 = vmul.f32 %v706, 0.01
    %v710 = vmax.f32 %v704, %v708
    %v711 = vmax.f32 %v706, %v709
    %v712 = vld [vmem:[#allocation11] sm:$0xf]
    %v713 = vld [vmem:[#allocation11 + $0x4] sm:$0xf]
    %v714 = vld [vmem:[#allocation4] sm:$0xf]
    %v715 = vld [vmem:[#allocation4 + $0x4] sm:$0xf]
    %v716 = vld [vmem:[#allocation4 + $0x8] sm:$0xf]
    %v717 = vld [vmem:[#allocation4 + $0xc] sm:$0xf]
    %v720 = vunpack.c.l.b16 %v712
    %v721 = vunpack.c.l.b16 %v713
    %v722 = vpack.c.b16 %v721, %v720
    %v727 = vunpack.c.l.b16 %v714
    %v728 = vunpack.c.l.b16 %v715
    %v729 = vunpack.c.l.b16 %v716
    %v730 = vunpack.c.l.b16 %v717
    %v731 = vpack.c.b16 %v728, %v727
    %v732 = vpack.c.b16 %v730, %v729
    %v736 = vsel %vm637, %v722, 0
    %738 = vmatpush.bf16.msra.mxu0 0
    %739 = vmatpush.bf16.msra.mxu0 0
    %740 = vmatpush.bf16.msra.mxu0 0
    %741 = vmatpush.bf16.msra.mxu0 0
    %742 = vmatpush.bf16.msra.mxu0 0
    %743 = vmatpush.bf16.msra.mxu0 0
    %744 = vmatpush.bf16.msra.mxu0 %v732
    %745 = vmatpush.bf16.msra.mxu0 %v731
    %746 = vmatmul.bf16.gmra.mxu0 %v736
    %v747 = vpop.f32.mrf.mxu0
    %v748 = vadd.f32 0.0, %v747
    %v749 = vpop.f32.mrf.mxu0
    %v750 = vadd.f32 0.0, %v749
    %751 = vdwg.mxu0
    %v752 = vmul.f32 %v748, 0.01
    %v753 = vmul.f32 %v750, 0.01
    %v754 = vmax.f32 %v748, %v752
    %v755 = vmax.f32 %v750, %v753
    %v756 = vpack.c.bf16 %v658, %v657
    %v757 = vpack.c.bf16 %v711, %v710
    %v758 = vpack.c.bf16 %v755, %v754
    %v759 = vld [vmem:[#allocation13 + $0x1c0] sm:$0xff]
    %v760 = vld [vmem:[#allocation13 + $0x1dc] sm:$0xff]
    %v761 = vld [vmem:[#allocation13 + $0x1f8] sm:$0xff]
    %v762 = vld [vmem:[#allocation13 + $0x214] sm:$0xff]
    %v763 = vld [vmem:[#allocation13 + $0x230] sm:$0xff]
    %v764 = vld [vmem:[#allocation13 + $0x24c] sm:$0xff]
    %v765 = vld [vmem:[#allocation13 + $0x268] sm:$0xff]
    %v766 = vld [vmem:[#allocation13 + $0x284] sm:$0xff]
    %v767 = vld [vmem:[#allocation13 + $0x2a0] sm:$0xff]
    %v768 = vld [vmem:[#allocation13 + $0x2bc] sm:$0xff]
    %v769 = vld [vmem:[#allocation13 + $0x2d8] sm:$0xff]
    %v770 = vld [vmem:[#allocation13 + $0x2f4] sm:$0xff]
    %v771 = vld [vmem:[#allocation13 + $0x310] sm:$0xff]
    %v772 = vld [vmem:[#allocation13 + $0x32c] sm:$0xff]
    %v773 = vld [vmem:[#allocation13 + $0x348] sm:$0xff]
    %v774 = vld [vmem:[#allocation13 + $0x364] sm:$0xff]
    %v791 = vunpack.c.l.b16 %v759
    %v792 = vunpack.c.h.b16 %v759
    %v793 = vunpack.c.l.b16 %v760
    %v794 = vunpack.c.h.b16 %v760
    %v795 = vunpack.c.l.b16 %v761
    %v796 = vunpack.c.h.b16 %v761
    %v797 = vunpack.c.l.b16 %v762
    %v798 = vunpack.c.h.b16 %v762
    %v799 = vunpack.c.l.b16 %v763
    %v800 = vunpack.c.h.b16 %v763
    %v801 = vunpack.c.l.b16 %v764
    %v802 = vunpack.c.h.b16 %v764
    %v803 = vunpack.c.l.b16 %v765
    %v804 = vunpack.c.h.b16 %v765
    %v805 = vunpack.c.l.b16 %v766
    %v806 = vunpack.c.h.b16 %v766
    %v807 = vunpack.c.l.b16 %v767
    %v808 = vunpack.c.h.b16 %v767
    %v809 = vunpack.c.l.b16 %v768
    %v810 = vunpack.c.h.b16 %v768
    %v811 = vunpack.c.l.b16 %v769
    %v812 = vunpack.c.h.b16 %v769
    %v813 = vunpack.c.l.b16 %v770
    %v814 = vunpack.c.h.b16 %v770
    %v815 = vunpack.c.l.b16 %v771
    %v816 = vunpack.c.h.b16 %v771
    %v817 = vunpack.c.l.b16 %v772
    %v818 = vunpack.c.h.b16 %v772
    %v819 = vunpack.c.l.b16 %v773
    %v820 = vunpack.c.h.b16 %v773
    %v821 = vunpack.c.l.b16 %v774
    %v822 = vunpack.c.h.b16 %v774
    %v823 = vpack.c.b16 %v793, %v791
    %v824 = vpack.c.b16 %v794, %v792
    %v825 = vpack.c.b16 %v797, %v795
    %v826 = vpack.c.b16 %v798, %v796
    %v827 = vpack.c.b16 %v801, %v799
    %v828 = vpack.c.b16 %v802, %v800
    %v829 = vpack.c.b16 %v805, %v803
    %v830 = vpack.c.b16 %v806, %v804
    %v831 = vpack.c.b16 %v809, %v807
    %v832 = vpack.c.b16 %v810, %v808
    %v833 = vpack.c.b16 %v813, %v811
    %v834 = vpack.c.b16 %v814, %v812
    %v835 = vpack.c.b16 %v817, %v815
    %v836 = vpack.c.b16 %v818, %v816
    %v837 = vpack.c.b16 %v821, %v819
    %v838 = vpack.c.b16 %v822, %v820
    %855 = vmatpush.bf16.msra.mxu0 %v837
    %856 = vmatpush.bf16.msra.mxu0 %v835
    %857 = vmatpush.bf16.msra.mxu0 %v833
    %858 = vmatpush.bf16.msra.mxu0 %v831
    %859 = vmatpush.bf16.msra.mxu0 %v829
    %860 = vmatpush.bf16.msra.mxu0 %v827
    %861 = vmatpush.bf16.msra.mxu0 %v825
    %862 = vmatpush.bf16.msra.mxu0 %v823
    %863 = vmatmul.bf16.gmra.mxu0 %v756
    %v864 = vpop.f32.mrf.mxu0
    %v865 = vadd.f32 0.0, %v864
    %v866 = vpop.f32.mrf.mxu0
    %v867 = vadd.f32 0.0, %v866
    %868 = vdwg.mxu0
    %869 = vmatpush.bf16.msra.mxu0 %v838
    %870 = vmatpush.bf16.msra.mxu0 %v836
    %871 = vmatpush.bf16.msra.mxu0 %v834
    %872 = vmatpush.bf16.msra.mxu0 %v832
    %873 = vmatpush.bf16.msra.mxu0 %v830
    %874 = vmatpush.bf16.msra.mxu0 %v828
    %875 = vmatpush.bf16.msra.mxu0 %v826
    %876 = vmatpush.bf16.msra.mxu0 %v824
    %877 = vmatmul.bf16.gmra.mxu0 %v756
    %v878 = vpop.f32.mrf.mxu0
    %v879 = vadd.f32 0.0, %v878
    %v880 = vpop.f32.mrf.mxu0
    %v881 = vadd.f32 0.0, %v880
    %882 = vdwg.mxu0
    %v883 = vpack.c.bf16 %v879, %v865
    %v884 = vpack.c.bf16 %v881, %v867
    %v885 = vld [vmem:[#allocation13 + $0x1c8] sm:$0xff]
    %v886 = vld [vmem:[#allocation13 + $0x1d0] sm:$0xf]
    %v887 = vld [vmem:[#allocation13 + $0x1e4] sm:$0xff]
    %v888 = vld [vmem:[#allocation13 + $0x1ec] sm:$0xf]
    %v889 = vld [vmem:[#allocation13 + $0x200] sm:$0xff]
    %v890 = vld [vmem:[#allocation13 + $0x208] sm:$0xf]
    %v891 = vld [vmem:[#allocation13 + $0x21c] sm:$0xff]
    %v892 = vld [vmem:[#allocation13 + $0x224] sm:$0xf]
    %v893 = vld [vmem:[#allocation13 + $0x238] sm:$0xff]
    %v894 = vld [vmem:[#allocation13 + $0x240] sm:$0xf]
    %v895 = vld [vmem:[#allocation13 + $0x254] sm:$0xff]
    %v896 = vld [vmem:[#allocation13 + $0x25c] sm:$0xf]
    %v897 = vld [vmem:[#allocation13 + $0x270] sm:$0xff]
    %v898 = vld [vmem:[#allocation13 + $0x278] sm:$0xf]
    %v899 = vld [vmem:[#allocation13 + $0x28c] sm:$0xff]
    %v900 = vld [vmem:[#allocation13 + $0x294] sm:$0xf]
    %v901 = vld [vmem:[#allocation13 + $0x2a8] sm:$0xff]
    %v902 = vld [vmem:[#allocation13 + $0x2b0] sm:$0xf]
    %v903 = vld [vmem:[#allocation13 + $0x2c4] sm:$0xff]
    %v904 = vld [vmem:[#allocation13 + $0x2cc] sm:$0xf]
    %v905 = vld [vmem:[#allocation13 + $0x2e0] sm:$0xff]
    %v906 = vld [vmem:[#allocation13 + $0x2e8] sm:$0xf]
    %v907 = vld [vmem:[#allocation13 + $0x2fc] sm:$0xff]
    %v908 = vld [vmem:[#allocation13 + $0x304] sm:$0xf]
    %v909 = vld [vmem:[#allocation13 + $0x318] sm:$0xff]
    %v910 = vld [vmem:[#allocation13 + $0x320] sm:$0xf]
    %v911 = vld [vmem:[#allocation13 + $0x334] sm:$0xff]
    %v912 = vld [vmem:[#allocation13 + $0x33c] sm:$0xf]
    %v913 = vld [vmem:[#allocation13 + $0x350] sm:$0xff]
    %v914 = vld [vmem:[#allocation13 + $0x358] sm:$0xf]
    %v915 = vld [vmem:[#allocation13 + $0x36c] sm:$0xff]
    %v916 = vld [vmem:[#allocation13 + $0x374] sm:$0xf]
    %v949 = vunpack.c.l.b16 %v885
    %v950 = vunpack.c.h.b16 %v885
    %v951 = vunpack.c.l.b16 %v886
    %v952 = vunpack.c.l.b16 %v887
    %v953 = vunpack.c.h.b16 %v887
    %v954 = vunpack.c.l.b16 %v888
    %v955 = vunpack.c.l.b16 %v889
    %v956 = vunpack.c.h.b16 %v889
    %v957 = vunpack.c.l.b16 %v890
    %v958 = vunpack.c.l.b16 %v891
    %v959 = vunpack.c.h.b16 %v891
    %v960 = vunpack.c.l.b16 %v892
    %v961 = vunpack.c.l.b16 %v893
    %v962 = vunpack.c.h.b16 %v893
    %v963 = vunpack.c.l.b16 %v894
    %v964 = vunpack.c.l.b16 %v895
    %v965 = vunpack.c.h.b16 %v895
    %v966 = vunpack.c.l.b16 %v896
    %v967 = vunpack.c.l.b16 %v897
    %v968 = vunpack.c.h.b16 %v897
    %v969 = vunpack.c.l.b16 %v898
    %v970 = vunpack.c.l.b16 %v899
    %v971 = vunpack.c.h.b16 %v899
    %v972 = vunpack.c.l.b16 %v900
    %v973 = vunpack.c.l.b16 %v901
    %v974 = vunpack.c.h.b16 %v901
    %v975 = vunpack.c.l.b16 %v902
    %v976 = vunpack.c.l.b16 %v903
    %v977 = vunpack.c.h.b16 %v903
    %v978 = vunpack.c.l.b16 %v904
    %v979 = vunpack.c.l.b16 %v905
    %v980 = vunpack.c.h.b16 %v905
    %v981 = vunpack.c.l.b16 %v906
    %v982 = vunpack.c.l.b16 %v907
    %v983 = vunpack.c.h.b16 %v907
    %v984 = vunpack.c.l.b16 %v908
    %v985 = vunpack.c.l.b16 %v909
    %v986 = vunpack.c.h.b16 %v909
    %v987 = vunpack.c.l.b16 %v910
    %v988 = vunpack.c.l.b16 %v911
    %v989 = vunpack.c.h.b16 %v911
    %v990 = vunpack.c.l.b16 %v912
    %v991 = vunpack.c.l.b16 %v913
    %v992 = vunpack.c.h.b16 %v913
    %v993 = vunpack.c.l.b16 %v914
    %v994 = vunpack.c.l.b16 %v915
    %v995 = vunpack.c.h.b16 %v915
    %v996 = vunpack.c.l.b16 %v916
    %v997 = vpack.c.b16 %v952, %v949
    %v998 = vpack.c.b16 %v953, %v950
    %v999 = vpack.c.b16 %v954, %v951
    %v1000 = vpack.c.b16 %v958, %v955
    %v1001 = vpack.c.b16 %v959, %v956
    %v1002 = vpack.c.b16 %v960, %v957
    %v1003 = vpack.c.b16 %v964, %v961
    %v1004 = vpack.c.b16 %v965, %v962
    %v1005 = vpack.c.b16 %v966, %v963
    %v1006 = vpack.c.b16 %v970, %v967
    %v1007 = vpack.c.b16 %v971, %v968
    %v1008 = vpack.c.b16 %v972, %v969
    %v1009 = vpack.c.b16 %v976, %v973
    %v1010 = vpack.c.b16 %v977, %v974
    %v1011 = vpack.c.b16 %v978, %v975
    %v1012 = vpack.c.b16 %v982, %v979
    %v1013 = vpack.c.b16 %v983, %v980
    %v1014 = vpack.c.b16 %v984, %v981
    %v1015 = vpack.c.b16 %v988, %v985
    %v1016 = vpack.c.b16 %v989, %v986
    %v1017 = vpack.c.b16 %v990, %v987
    %v1018 = vpack.c.b16 %v994, %v991
    %v1019 = vpack.c.b16 %v995, %v992
    %v1020 = vpack.c.b16 %v996, %v993
    %1045 = vmatpush.bf16.msra.mxu0 %v1018
    %1046 = vmatpush.bf16.msra.mxu0 %v1015
    %1047 = vmatpush.bf16.msra.mxu0 %v1012
    %1048 = vmatpush.bf16.msra.mxu0 %v1009
    %1049 = vmatpush.bf16.msra.mxu0 %v1006
    %1050 = vmatpush.bf16.msra.mxu0 %v1003
    %1051 = vmatpush.bf16.msra.mxu0 %v1000
    %1052 = vmatpush.bf16.msra.mxu0 %v997
    %1053 = vmatmul.bf16.gmra.mxu0 %v757
    %v1054 = vpop.f32.mrf.mxu0
    %v1055 = vadd.f32 0.0, %v1054
    %v1056 = vpop.f32.mrf.mxu0
    %v1057 = vadd.f32 0.0, %v1056
    %1058 = vdwg.mxu0
    %1059 = vmatpush.bf16.msra.mxu0 %v1019
    %1060 = vmatpush.bf16.msra.mxu0 %v1016
    %1061 = vmatpush.bf16.msra.mxu0 %v1013
    %1062 = vmatpush.bf16.msra.mxu0 %v1010
    %1063 = vmatpush.bf16.msra.mxu0 %v1007
    %1064 = vmatpush.bf16.msra.mxu0 %v1004
    %1065 = vmatpush.bf16.msra.mxu0 %v1001
    %1066 = vmatpush.bf16.msra.mxu0 %v998
    %1067 = vmatmul.bf16.gmra.mxu0 %v757
    %v1068 = vpop.f32.mrf.mxu0
    %v1069 = vadd.f32 0.0, %v1068
    %v1070 = vpop.f32.mrf.mxu0
    %v1071 = vadd.f32 0.0, %v1070
    %1072 = vdwg.mxu0
    %1073 = vmatpush.bf16.msra.mxu0 %v1020
    %1074 = vmatpush.bf16.msra.mxu0 %v1017
    %1075 = vmatpush.bf16.msra.mxu0 %v1014
    %1076 = vmatpush.bf16.msra.mxu0 %v1011
    %1077 = vmatpush.bf16.msra.mxu0 %v1008
    %1078 = vmatpush.bf16.msra.mxu0 %v1005
    %1079 = vmatpush.bf16.msra.mxu0 %v1002
    %1080 = vmatpush.bf16.msra.mxu0 %v999
    %1081 = vmatmul.bf16.gmra.mxu0 %v757
    %v1082 = vpop.f32.mrf.mxu0
    %v1083 = vadd.f32 0.0, %v1082
    %v1084 = vpop.f32.mrf.mxu0
    %v1085 = vadd.f32 0.0, %v1084
    %1086 = vdwg.mxu0
    %v1087 = vpack.c.bf16 %v1069, %v1055
    %v1088 = vpack.c.bf16 %v1083, %v1083
    %v1089 = vpack.c.bf16 %v1071, %v1057
    %v1090 = vpack.c.bf16 %v1085, %v1085
    %v1091 = vld [vmem:[#allocation13 + $0x1d4] sm:$0xff]
    %v1092 = vld [vmem:[#allocation13 + $0x1f0] sm:$0xff]
    %v1093 = vld [vmem:[#allocation13 + $0x20c] sm:$0xff]
    %v1094 = vld [vmem:[#allocation13 + $0x228] sm:$0xff]
    %v1095 = vld [vmem:[#allocation13 + $0x244] sm:$0xff]
    %v1096 = vld [vmem:[#allocation13 + $0x260] sm:$0xff]
    %v1097 = vld [vmem:[#allocation13 + $0x27c] sm:$0xff]
    %v1098 = vld [vmem:[#allocation13 + $0x298] sm:$0xff]
    %v1099 = vld [vmem:[#allocation13 + $0x2b4] sm:$0xff]
    %v1100 = vld [vmem:[#allocation13 + $0x2d0] sm:$0xff]
    %v1101 = vld [vmem:[#allocation13 + $0x2ec] sm:$0xff]
    %v1102 = vld [vmem:[#allocation13 + $0x308] sm:$0xff]
    %v1103 = vld [vmem:[#allocation13 + $0x324] sm:$0xff]
    %v1104 = vld [vmem:[#allocation13 + $0x340] sm:$0xff]
    %v1105 = vld [vmem:[#allocation13 + $0x35c] sm:$0xff]
    %v1106 = vld [vmem:[#allocation13 + $0x378] sm:$0xff]
    %v1123 = vunpack.c.l.b16 %v1091
    %v1124 = vunpack.c.h.b16 %v1091
    %v1125 = vunpack.c.l.b16 %v1092
    %v1126 = vunpack.c.h.b16 %v1092
    %v1127 = vunpack.c.l.b16 %v1093
    %v1128 = vunpack.c.h.b16 %v1093
    %v1129 = vunpack.c.l.b16 %v1094
    %v1130 = vunpack.c.h.b16 %v1094
    %v1131 = vunpack.c.l.b16 %v1095
    %v1132 = vunpack.c.h.b16 %v1095
    %v1133 = vunpack.c.l.b16 %v1096
    %v1134 = vunpack.c.h.b16 %v1096
    %v1135 = vunpack.c.l.b16 %v1097
    %v1136 = vunpack.c.h.b16 %v1097
    %v1137 = vunpack.c.l.b16 %v1098
    %v1138 = vunpack.c.h.b16 %v1098
    %v1139 = vunpack.c.l.b16 %v1099
    %v1140 = vunpack.c.h.b16 %v1099
    %v1141 = vunpack.c.l.b16 %v1100
    %v1142 = vunpack.c.h.b16 %v1100
    %v1143 = vunpack.c.l.b16 %v1101
    %v1144 = vunpack.c.h.b16 %v1101
    %v1145 = vunpack.c.l.b16 %v1102
    %v1146 = vunpack.c.h.b16 %v1102
    %v1147 = vunpack.c.l.b16 %v1103
    %v1148 = vunpack.c.h.b16 %v1103
    %v1149 = vunpack.c.l.b16 %v1104
    %v1150 = vunpack.c.h.b16 %v1104
    %v1151 = vunpack.c.l.b16 %v1105
    %v1152 = vunpack.c.h.b16 %v1105
    %v1153 = vunpack.c.l.b16 %v1106
    %v1154 = vunpack.c.h.b16 %v1106
    %v1155 = vpack.c.b16 %v1125, %v1123
    %v1156 = vpack.c.b16 %v1126, %v1124
    %v1157 = vpack.c.b16 %v1129, %v1127
    %v1158 = vpack.c.b16 %v1130, %v1128
    %v1159 = vpack.c.b16 %v1133, %v1131
    %v1160 = vpack.c.b16 %v1134, %v1132
    %v1161 = vpack.c.b16 %v1137, %v1135
    %v1162 = vpack.c.b16 %v1138, %v1136
    %v1163 = vpack.c.b16 %v1141, %v1139
    %v1164 = vpack.c.b16 %v1142, %v1140
    %v1165 = vpack.c.b16 %v1145, %v1143
    %v1166 = vpack.c.b16 %v1146, %v1144
    %v1167 = vpack.c.b16 %v1149, %v1147
    %v1168 = vpack.c.b16 %v1150, %v1148
    %v1169 = vpack.c.b16 %v1153, %v1151
    %v1170 = vpack.c.b16 %v1154, %v1152
    %1187 = vmatpush.bf16.msra.mxu0 %v1169
    %1188 = vmatpush.bf16.msra.mxu0 %v1167
    %1189 = vmatpush.bf16.msra.mxu0 %v1165
    %1190 = vmatpush.bf16.msra.mxu0 %v1163
    %1191 = vmatpush.bf16.msra.mxu0 %v1161
    %1192 = vmatpush.bf16.msra.mxu0 %v1159
    %1193 = vmatpush.bf16.msra.mxu0 %v1157
    %1194 = vmatpush.bf16.msra.mxu0 %v1155
    %1195 = vmatmul.bf16.gmra.mxu0 %v758
    %v1196 = vpop.f32.mrf.mxu0
    %v1197 = vadd.f32 0.0, %v1196
    %v1198 = vpop.f32.mrf.mxu0
    %v1199 = vadd.f32 0.0, %v1198
    %1200 = vdwg.mxu0
    %1201 = vmatpush.bf16.msra.mxu0 %v1170
    %1202 = vmatpush.bf16.msra.mxu0 %v1168
    %1203 = vmatpush.bf16.msra.mxu0 %v1166
    %1204 = vmatpush.bf16.msra.mxu0 %v1164
    %1205 = vmatpush.bf16.msra.mxu0 %v1162
    %1206 = vmatpush.bf16.msra.mxu0 %v1160
    %1207 = vmatpush.bf16.msra.mxu0 %v1158
    %1208 = vmatpush.bf16.msra.mxu0 %v1156
    %1209 = vmatmul.bf16.gmra.mxu0 %v758
    %v1210 = vpop.f32.mrf.mxu0
    %v1211 = vadd.f32 0.0, %v1210
    %v1212 = vpop.f32.mrf.mxu0
    %v1213 = vadd.f32 0.0, %v1212
    %1214 = vdwg.mxu0
    %v1215 = vpack.c.bf16 %v1211, %v1197
    %v1216 = vpack.c.bf16 %v1213, %v1199
    %1217 = vst [vmem:[#allocation2] sm:$0xf] %v883
    %1218 = vst [vmem:[#allocation2 + $0x4] sm:$0xf] %v884
    %1219 = vst [vmem:[#allocation2 + $0x8] sm:$0xf] %v1087
    %1220 = vst [vmem:[#allocation2 + $0xc] sm:$0xf] %v1089
    %v1223 = vrot.slane %v883, 4
    %v1224 = vrot.slane %v884, 4
    %1227 = vst [vmem:[#allocation3] sm:$0xf] %v1223
    %1228 = vst [vmem:[#allocation3 + $0x4] sm:$0xf] %v1224
    %v1231 = vrot.slane %v1087, 4
    %v1232 = vrot.slane %v1089, 4
    %1235 = vst [vmem:[#allocation3 + $0x8] sm:$0xf] %v1231
    %1236 = vst [vmem:[#allocation3 + $0xc] sm:$0xf] %v1232
    %1237 = vst [vmem:[#allocation3 + $0x10] sm:$0xf] %v1215
    %1238 = vst [vmem:[#allocation3 + $0x14] sm:$0xf] %v1216
    %1239 = vst [vmem:[#allocation4] sm:$0xf] %v1088
    %1240 = vst [vmem:[#allocation4 + $0x4] sm:$0xf] %v1090
    %v1243 = vrot.slane %v1215, 4
    %v1244 = vrot.slane %v1216, 4
    %1247 = vst [vmem:[#allocation4 + $0x8] sm:$0xf] %v1243
    %1248 = vst [vmem:[#allocation4 + $0xc] sm:$0xf] %v1244
    %v1249 = vld [vmem:[#allocation8] sm:$0xf]
    %v1250 = vld [vmem:[#allocation8 + $0x4] sm:$0xf]
    %v1251 = vld [vmem:[#allocation2] sm:$0xf]
    %v1252 = vld [vmem:[#allocation2 + $0x4] sm:$0xf]
    %v1253 = vld [vmem:[#allocation2 + $0x8] sm:$0xf]
    %v1254 = vld [vmem:[#allocation2 + $0xc] sm:$0xf]
    %v1257 = vunpack.c.l.b16 %v1249
    %v1258 = vunpack.c.l.b16 %v1250
    %v1259 = vpack.c.b16 %v1258, %v1257
    %v1264 = vunpack.c.l.b16 %v1251
    %v1265 = vunpack.c.l.b16 %v1252
    %v1266 = vunpack.c.l.b16 %v1253
    %v1267 = vunpack.c.l.b16 %v1254
    %v1268 = vpack.c.b16 %v1265, %v1264
    %v1269 = vpack.c.b16 %v1267, %v1266
    %v1273 = vsel %vm637, %v1259, 0
    %1275 = vmatpush.bf16.msra.mxu0 0
    %1276 = vmatpush.bf16.msra.mxu0 0
    %1277 = vmatpush.bf16.msra.mxu0 0
    %1278 = vmatpush.bf16.msra.mxu0 0
    %1279 = vmatpush.bf16.msra.mxu0 0
    %1280 = vmatpush.bf16.msra.mxu0 0
    %1281 = vmatpush.bf16.msra.mxu0 %v1269
    %1282 = vmatpush.bf16.msra.mxu0 %v1268
    %1283 = vmatmul.bf16.gmra.mxu0 %v1273
    %v1284 = vpop.f32.mrf.mxu0
    %v1285 = vadd.f32 0.0, %v1284
    %v1286 = vpop.f32.mrf.mxu0
    %v1287 = vadd.f32 0.0, %v1286
    %1288 = vdwg.mxu0
    %v1289 = vmul.f32 %v1285, 0.01
    %v1290 = vmul.f32 %v1287, 0.01
    %v1291 = vmax.f32 %v1285, %v1289
    %v1292 = vmax.f32 %v1287, %v1290
    %v1293 = vld [vmem:[#allocation10] sm:$0xf]
    %v1294 = vld [vmem:[#allocation10 + $0x4] sm:$0xf]
    %v1295 = vld [vmem:[#allocation3] sm:$0xf]
    %v1296 = vld [vmem:[#allocation3 + $0x4] sm:$0xf]
    %v1297 = vld [vmem:[#allocation3 + $0x8] sm:$0xf]
    %v1298 = vld [vmem:[#allocation3 + $0xc] sm:$0xf]
    %v1299 = vld [vmem:[#allocation3 + $0x10] sm:$0xf]
    %v1300 = vld [vmem:[#allocation3 + $0x14] sm:$0xf]
    %v1303 = vunpack.c.l.b16 %v1293
    %v1304 = vunpack.c.l.b16 %v1294
    %v1305 = vpack.c.b16 %v1304, %v1303
    %v1312 = vunpack.c.l.b16 %v1295
    %v1313 = vunpack.c.l.b16 %v1296
    %v1314 = vunpack.c.l.b16 %v1297
    %v1315 = vunpack.c.l.b16 %v1298
    %v1316 = vunpack.c.l.b16 %v1299
    %v1317 = vunpack.c.l.b16 %v1300
    %v1318 = vpack.c.b16 %v1313, %v1312
    %v1319 = vpack.c.b16 %v1315, %v1314
    %v1320 = vpack.c.b16 %v1317, %v1316
    %v1325 = vsel %vm690, %v1305, 0
    %1327 = vmatpush.bf16.msra.mxu0 0
    %1328 = vmatpush.bf16.msra.mxu0 0
    %1329 = vmatpush.bf16.msra.mxu0 0
    %1330 = vmatpush.bf16.msra.mxu0 0
    %1331 = vmatpush.bf16.msra.mxu0 0
    %1332 = vmatpush.bf16.msra.mxu0 %v1320
    %1333 = vmatpush.bf16.msra.mxu0 %v1319
    %1334 = vmatpush.bf16.msra.mxu0 %v1318
    %1335 = vmatmul.bf16.gmra.mxu0 %v1325
    %v1336 = vpop.f32.mrf.mxu0
    %v1337 = vadd.f32 0.0, %v1336
    %v1338 = vpop.f32.mrf.mxu0
    %v1339 = vadd.f32 0.0, %v1338
    %1340 = vdwg.mxu0
    %v1341 = vmul.f32 %v1337, 0.01
    %v1342 = vmul.f32 %v1339, 0.01
    %v1343 = vmax.f32 %v1337, %v1341
    %v1344 = vmax.f32 %v1339, %v1342
    %v1345 = vld [vmem:[#allocation11] sm:$0xf]
    %v1346 = vld [vmem:[#allocation11 + $0x4] sm:$0xf]
    %v1347 = vld [vmem:[#allocation4] sm:$0xf]
    %v1348 = vld [vmem:[#allocation4 + $0x4] sm:$0xf]
    %v1349 = vld [vmem:[#allocation4 + $0x8] sm:$0xf]
    %v1350 = vld [vmem:[#allocation4 + $0xc] sm:$0xf]
    %v1353 = vunpack.c.l.b16 %v1345
    %v1354 = vunpack.c.l.b16 %v1346
    %v1355 = vpack.c.b16 %v1354, %v1353
    %v1360 = vunpack.c.l.b16 %v1347
    %v1361 = vunpack.c.l.b16 %v1348
    %v1362 = vunpack.c.l.b16 %v1349
    %v1363 = vunpack.c.l.b16 %v1350
    %v1364 = vpack.c.b16 %v1361, %v1360
    %v1365 = vpack.c.b16 %v1363, %v1362
    %v1369 = vsel %vm637, %v1355, 0
    %1371 = vmatpush.bf16.msra.mxu0 0
    %1372 = vmatpush.bf16.msra.mxu0 0
    %1373 = vmatpush.bf16.msra.mxu0 0
    %1374 = vmatpush.bf16.msra.mxu0 0
    %1375 = vmatpush.bf16.msra.mxu0 0
    %1376 = vmatpush.bf16.msra.mxu0 0
    %1377 = vmatpush.bf16.msra.mxu0 %v1365
    %1378 = vmatpush.bf16.msra.mxu0 %v1364
    %1379 = vmatmul.bf16.gmra.mxu0 %v1369
    %v1380 = vpop.f32.mrf.mxu0
    %v1381 = vadd.f32 0.0, %v1380
    %v1382 = vpop.f32.mrf.mxu0
    %v1383 = vadd.f32 0.0, %v1382
    %1384 = vdwg.mxu0
    %v1385 = vmul.f32 %v1381, 0.01
    %v1386 = vmul.f32 %v1383, 0.01
    %v1387 = vmax.f32 %v1381, %v1385
    %v1388 = vmax.f32 %v1383, %v1386
    %1389 = vst [vmem:[#allocation14] sm:$0xff] %v1291
    %1390 = vst [vmem:[#allocation14 + $0x8] sm:$0xff] %v1292
    %1391 = vst [vmem:[#allocation14 + $0x10] sm:$0xff] %v1343
    %1392 = vst [vmem:[#allocation14 + $0x18] sm:$0xff] %v1344
    %1393 = vst [vmem:[#allocation14 + $0x20] sm:$0xff] %v1387
    %1394 = vst [vmem:[#allocation14 + $0x28] sm:$0xff] %v1388
    // Predicated region
    $region42: #{tpu_custom_call.1} parent=1 // pred_check
      _
    $region43: #{tpu_custom_call.1} parent=1 // pred_check_branch
      %1396 = sbr.rel (0) target = $region45
    $region44: #{tpu_custom_call.1} parent=1 // pred_region
      %1398 = vsyncadd [#allocation7], 0
      %s1399 = sshll.u32 [#allocation14], 4
      %s1400 = int_to_ptr.vmem [resolvable:$true] %s1399
      %s1401 = sshll.u32 %s5, 4
      %s1402 = int_to_ptr.hbm [resolvable:$true] %s1401
      %1407 = dma.vmem_to_hbm [thread:$0]  %s1400, 768, %s1402, [#allocation7], 128, 128, 8
    $region45: #{tpu_custom_call.1} parent=1 // pred_fallthru
      _
    // Predicated region
    $region46: #{tpu_custom_call.1} parent=1 // pred_check
      _
    $region47: #{tpu_custom_call.1} parent=1 // pred_check_branch
      %1409 = sbr.rel (0) target = $region49
    $region48: #{tpu_custom_call.1} parent=1 // pred_region
      %1411 = dma.done [#allocation7], 768
    $region49: #{tpu_custom_call.1} parent=1 // pred_fallthru
      _
    %1412 = vsyncpa [#allocation6], 1
    %1413 = vsyncpa [#allocation9], 1
    %1414 = vsyncpa [#allocation12], 1
    %1415 = vsyncpa [#allocation7], 1

</llo_original>
